<compile_context>
chip_gen: v7x
topology: tpu7x:2x2x1
jax: 0.10.0
libtpu: 0.0.40
codegen_flags: <defaults>
</compile_context>

<pallas_src>
from functools import partial

import jax
import jax.numpy as jnp
from jax.experimental import pallas as pl
from jax.experimental.pallas import tpu as pltpu

LANE = 128
SUBLANE = 8
_MAX_BATCH_TILE = 512  # v6e sweet spot 256-512; v5e MXU saturates M at ~128-256.


def _round_up(n, m):
    return ((n + m - 1) // m) * m


_PHYS_VMEM_BYTES = None


def _physical_vmem_bytes():
    """Per-TensorCore VMEM capacity; conservative (v7x) fallback if query fails."""
    global _PHYS_VMEM_BYTES
    if _PHYS_VMEM_BYTES is None:
        try:
            _PHYS_VMEM_BYTES = int(pltpu.get_tpu_info().vmem_capacity_bytes)
        except Exception:
            _PHYS_VMEM_BYTES = 64 << 20
    return _PHYS_VMEM_BYTES


# ----------------------------------------------------------------------------
# Kernel
# ----------------------------------------------------------------------------
def cont_gru_delay_kernel(x_ref, h_ref, cg_ref,
                          wcat_ref, urz_ref, uh_ref,
                          brz_ref, bh_ref,
                          out_ref):
    f32 = jnp.float32
    TB = x_ref.shape[0]          # batch tile (multiple of 8)
    Hp = h_ref.shape[1]          # padded hidden dim (multiple of 128)

    x = x_ref[...].astype(f32)
    h = h_ref[...].astype(f32)
    cg = cg_ref[...].astype(f32)          # control gradient dxdt.derivative(t)
    W_cat = wcat_ref[...]                 # (I, 3Hp)   [Wr|Wz|Wh]
    U_rz = urz_ref[...]                   # (Hp, 2Hp)  [Ur|Uz]
    U_h = uh_ref[...]                     # (Hp, Hp)
    b_rz = brz_ref[...].astype(f32)       # (1, 2Hp)   [br|bz]
    b_h = bh_ref[...].astype(f32)         # (1, Hp)

    def mm(a, w):
        # MXU matmul; LHS cast to the (possibly bf16) weight dtype, f32 accum.
        return jnp.dot(a.astype(w.dtype), w, preferred_element_type=f32)

    # t == 0 branch of the delay: past state is the current state.
    h_past = h

    # One fused matmul for the x-path AND the control-gradient path through
    # W_r|W_z|W_h (LHS stacked along the sublane/batch axis).
    xcg_w = mm(jnp.concatenate([x, cg], axis=0), W_cat)          # (2TB, 3Hp)
    xWh = xcg_w[:TB, 2 * Hp:]
    cgWr = xcg_w[TB:, :Hp]
    cgWz = xcg_w[TB:, Hp:2 * Hp]
    cgWh = xcg_w[TB:, 2 * Hp:]

    # r|z gate pre-activations are already adjacent lanes of the fused output
    # -> contiguous slice, no lane concat / extra VMEM copy.
    rz = jax.nn.sigmoid(xcg_w[:TB, :2 * Hp] + mm(h_past, U_rz) + b_rz)
    r = rz[:, :Hp]
    z = rz[:, Hp:]

    g = jnp.tanh(xWh + mm(r * h_past, U_h) + b_h)

    hg = h_past - g
    one_minus_z = 1.0 - z
    dhpast_dt = one_minus_z * (g - h)                            # t == 0 branch

    # Time derivatives (`W.weight @ v` in PyTorch == v @ W^T == v @ packed W).
    d_rz = mm(dhpast_dt, U_rz)                                   # (TB, 2Hp)
    dAdt = cgWz + d_rz[:, Hp:]
    dzdt = z * one_minus_z * dAdt
    drdt = r * (1.0 - r) * (cgWr + d_rz[:, :Hp])

    # TODO(synk): on v5e, if bundle dumps show the vst slot binding, split this
    # fused U_h matmul into two dots (the sublane concat materializes a copy).
    uh_out = mm(jnp.concatenate([drdt, r], axis=0), U_h)         # (2TB, Hp)
    dBdt = cgWh + uh_out[:TB] * h + uh_out[TB:] * dhpast_dt
    dgdt = (1.0 - g * g) * dBdt
    dhgdt = dhpast_dt - dgdt
    dhdt = dzdt * hg + z * dhgdt + dgdt

    out_ref[...] = dhdt.astype(out_ref.dtype)


# ----------------------------------------------------------------------------
# One-time parameter packing (do this OUTSIDE the hot path)
# ----------------------------------------------------------------------------
def prepare_params(params, weights_dtype=jnp.bfloat16):
    """Transpose to (in, out), fuse gates along lanes, pad hidden dim to 128.

    params holds PyTorch-layout tensors: W_* (H, I), U_* (H, H), b_* (H,).
    Default bf16 weights give the native MXU path on v5e/v6e/v7x (2x less
    weight DMA + VMEM); pass weights_dtype=jnp.float32 if the derivative-path
    cancellations need tighter precision.  Biases stay f32 (added post-matmul).
    """
    H, _ = params["W_r"].shape
    Hp = _round_up(H, LANE)

    def pad_w(w):  # (H, I) -> (I, Hp)
        return jnp.pad(w.T.astype(weights_dtype), ((0, 0), (0, Hp - H)))

    def pad_u(u):  # (H, H) -> (Hp, Hp)
        return jnp.pad(u.T.astype(weights_dtype), ((0, Hp - H), (0, Hp - H)))

    def pad_b(b):  # (H,) -> (1, Hp)
        return jnp.pad(b.astype(jnp.float32), (0, Hp - H))[None, :]

    return {
        "W_cat": jnp.concatenate(
            [pad_w(params["W_r"]), pad_w(params["W_z"]), pad_w(params["W_h"])],
            axis=1),                                             # (I, 3Hp)
        "U_rz": jnp.concatenate(
            [pad_u(params["U_r"]), pad_u(params["U_z"])], axis=1),  # (Hp, 2Hp)
        "U_h": pad_u(params["U_h"]),                             # (Hp, Hp)
        "b_rz": jnp.concatenate(
            [pad_b(params["b_r"]), pad_b(params["b_z"])], axis=1),  # (1, 2Hp)
        "b_h": pad_b(params["b_h"]),                             # (1, Hp)
    }


# ----------------------------------------------------------------------------
# VMEM budgeting & batch-tile selection
# ----------------------------------------------------------------------------
def _vmem_need_bytes(TB, I, Hp, w_itemsize, act_itemsize, out_itemsize):
    weights = w_itemsize * (I * 3 * Hp + Hp * 2 * Hp + Hp * Hp) + 4 * 3 * Hp
    acts = 2 * TB * (2 * I + Hp) * act_itemsize      # x, cg, h (double-buffered)
    outs = 2 * TB * Hp * out_itemsize                # output   (double-buffered)
    inter = 24 * TB * Hp * 4                         # f32 temporaries in the body
    return weights + acts + outs + inter


def _choose_batch_tile(B, I, Hp, w_itemsize, act_itemsize, out_itemsize):
    cap = int(0.85 * _physical_vmem_bytes())
    B8 = _round_up(B, SUBLANE)
    # >= 2 grid steps whenever the batch allows it, so v7x megacore
    # ("parallel" axis) has work for both TensorCores; tile capped at 512.
    n_tiles = max(2, -(-B8 // _MAX_BATCH_TILE)) if B8 >= 2 * SUBLANE else 1
    TB = _round_up(-(-B8 // n_tiles), SUBLANE)
    while TB > SUBLANE and _vmem_need_bytes(
            TB, I, Hp, w_itemsize, act_itemsize, out_itemsize) > cap:
        TB = _round_up(TB // 2, SUBLANE)
    return TB, _round_up(B8, TB)


# ----------------------------------------------------------------------------
# Wrapper
# ----------------------------------------------------------------------------
@partial(jax.jit, static_argnames=("hidden_channels", "single_buffer_weights"))
def _cont_gru_delay_impl(x, h, control_gradient, packed, *,
                         hidden_channels, single_buffer_weights):
    B, I = x.shape
    H = hidden_channels
    Hp = packed["U_h"].shape[0]
    w_itemsize = packed["U_h"].dtype.itemsize
    act_itemsize = max(x.dtype.itemsize, h.dtype.itemsize)
    out_itemsize = h.dtype.itemsize

    TB, Bp = _choose_batch_tile(B, I, Hp, w_itemsize, act_itemsize, out_itemsize)

    # Pad only when required; no f32 force-cast (kernel up-casts internally).
    xp = x if Bp == B else jnp.pad(x, ((0, Bp - B), (0, 0)))
    cgp = (control_gradient if Bp == B
           else jnp.pad(control_gradient, ((0, Bp - B), (0, 0))))
    hp = (h if (Bp == B and Hp == H)
          else jnp.pad(h, ((0, Bp - B), (0, Hp - H))))

    act_spec = lambda c: pl.BlockSpec((TB, c), lambda i: (i, 0))

    def res_spec(a):
        # Constant index_map -> fetched once, VMEM-resident across the batch
        # grid. Buffered(1) drops the useless second buffer (halves resident
        # weight VMEM; mandatory to fit large Hp on v7x's 64 MiB/TC).
        if single_buffer_weights:
            return pl.BlockSpec(a.shape, lambda i: (0, 0),
                                pipeline_mode=pl.Buffered(1))
        return pl.BlockSpec(a.shape, lambda i: (0, 0))

    vmem_limit = max(
        32 << 20,
        min(int(1.25 * _vmem_need_bytes(TB, I, Hp, w_itemsize,
                                        act_itemsize, out_itemsize)) + (8 << 20),
            int(0.85 * _physical_vmem_bytes())))

    out = pl.pallas_call(
        cont_gru_delay_kernel,
        out_shape=jax.ShapeDtypeStruct((Bp, Hp), h.dtype),
        grid=(Bp // TB,),
        in_specs=[act_spec(I), act_spec(Hp), act_spec(I),
                  res_spec(packed["W_cat"]), res_spec(packed["U_rz"]),
                  res_spec(packed["U_h"]), res_spec(packed["b_rz"]),
                  res_spec(packed["b_h"])],
        out_specs=pl.BlockSpec((TB, Hp), lambda i: (i, 0)),
        compiler_params=pltpu.CompilerParams(
            dimension_semantics=("parallel",),
            vmem_limit_bytes=vmem_limit),
    )(xp, hp, cgp, packed["W_cat"], packed["U_rz"], packed["U_h"],
      packed["b_rz"], packed["b_h"])

    if Bp != B or Hp != H:
        out = out[:B, :H]
    return out


def cont_gru_func_delay(x, h, control_gradient, packed, *, hidden_channels):
    # TODO(synk): when an ODE solver calls this once per timestep with small B,
    # weights are re-DMA'd from HBM every call (~(3Hp^2+3I*Hp)*bytes); keep them
    # VMEM-resident across steps (time grid axis / cross-call prefetch) if that
    # traffic dominates.
    try:
        return _cont_gru_delay_impl(x, h, control_gradient, packed,
                                    hidden_channels=hidden_channels,
                                    single_buffer_weights=True)
    except Exception:
        # Fallback for jax versions without single-buffer pipeline_mode support
        # (correct either way, just 2x resident weight VMEM).
        return _cont_gru_delay_impl(x, h, control_gradient, packed,
                                    hidden_channels=hidden_channels,
                                    single_buffer_weights=False)


# ----------------------------------------------------------------------------
# Pure-JAX reference (same t == 0 forward semantics) and param init
# ----------------------------------------------------------------------------
def _reference(x, h, cg, p):
    h_past = h
    r = jax.nn.sigmoid(x @ p["W_r"].T + h_past @ p["U_r"].T + p["b_r"])
    z = jax.nn.sigmoid(x @ p["W_z"].T + h_past @ p["U_z"].T + p["b_z"])
    g = jnp.tanh(x @ p["W_h"].T + (r * h_past) @ p["U_h"].T + p["b_h"])
    hg = h_past - g
    dhpast_dt = (1.0 - z) * (g - h)
    dAdt = cg @ p["W_z"].T + dhpast_dt @ p["U_z"].T
    dzdt = z * (1.0 - z) * dAdt
    drdt = r * (1.0 - r) * (cg @ p["W_r"].T + dhpast_dt @ p["U_r"].T)
    dBdt = cg @ p["W_h"].T + (drdt @ p["U_h"].T) * h + (r @ p["U_h"].T) * dhpast_dt
    dgdt = (1.0 - g) * (1.0 + g) * dBdt
    dhgdt = dhpast_dt - dgdt
    return dzdt * hg + z * dhgdt + dgdt


def init_params(key, input_channels, hidden_channels):
    """Deterministic PyTorch-Linear-style init: U(-1/sqrt(fan_in), 1/sqrt(fan_in))."""
    keys = jax.random.split(key, 9)
    ki = 1.0 / jnp.sqrt(jnp.float32(input_channels))
    kh = 1.0 / jnp.sqrt(jnp.float32(hidden_channels))
    u = lambda k, shape, s: jax.random.uniform(k, shape, jnp.float32, -s, s)
    return {
        "W_r": u(keys[0], (hidden_channels, input_channels), ki),
        "W_z": u(keys[1], (hidden_channels, input_channels), ki),
        "W_h": u(keys[2], (hidden_channels, input_channels), ki),
        "U_r": u(keys[3], (hidden_channels, hidden_channels), kh),
        "U_z": u(keys[4], (hidden_channels, hidden_channels), kh),
        "U_h": u(keys[5], (hidden_channels, hidden_channels), kh),
        "b_r": u(keys[6], (hidden_channels,), kh),
        "b_z": u(keys[7], (hidden_channels,), kh),
        "b_h": u(keys[8], (hidden_channels,), kh),
    }


if __name__ == "__main__":
    B, I, H = 8, 16, 32  # batch, input_channels, hidden_channels

    root = jax.random.PRNGKey(0)
    kp, kx, kh_, kc = jax.random.split(root, 4)
    params = init_params(kp, I, H)
    x = jax.random.normal(kx, (B, I), jnp.float32)
    h = jax.random.normal(kh_, (B, H), jnp.float32)
    control_gradient = jax.random.normal(kc, (B, I), jnp.float32)  # dxdt.derivative(t)

    ref = _reference(x, h, control_gradient, params)

    # f32-weight path (matches the reference tightly).
    packed_f32 = prepare_params(params, weights_dtype=jnp.float32)
    dhdt = cont_gru_func_delay(x, h, control_gradient, packed_f32,
                               hidden_channels=H)
    dhdt = jax.block_until_ready(dhdt)
    assert dhdt.shape == (B, H)
    assert jnp.allclose(dhdt, ref, atol=1e-4, rtol=1e-4)

    # bf16-weight path (default; native MXU dtype) — looser tolerance.
    packed_bf16 = prepare_params(params)  # bf16 by default
    dhdt_bf16 = cont_gru_func_delay(x, h, control_gradient, packed_bf16,
                                    hidden_channels=H)
    dhdt_bf16 = jax.block_until_ready(dhdt_bf16)
    assert jnp.allclose(dhdt_bf16, ref, atol=1e-1, rtol=1e-1)

    print("KERNEL_OK")
</pallas_src>

<mosaic_0001>
module attributes {stable_mosaic.version = 11 : i64} {
  func.func @cont_gru_delay_kernel(%arg0: i32, %arg1: memref<8x16xf32, #tpu.memory_space<vmem>>, %arg2: memref<8x128xf32, #tpu.memory_space<vmem>>, %arg3: memref<8x16xf32, #tpu.memory_space<vmem>>, %arg4: memref<16x384xf32, #tpu.memory_space<vmem>>, %arg5: memref<128x256xf32, #tpu.memory_space<vmem>>, %arg6: memref<128x128xf32, #tpu.memory_space<vmem>>, %arg7: memref<1x256xf32, #tpu.memory_space<vmem>>, %arg8: memref<1x128xf32, #tpu.memory_space<vmem>>, %arg9: memref<8x128xf32, #tpu.memory_space<vmem>>) attributes {dimension_semantics = [#tpu.dimension_semantics<parallel>], iteration_bounds = array<i64: 1>, scalar_prefetch = 0 : i64, scratch_operands = 0 : i64, tpu.core_type = #tpu.core_type<tc>, window_params = [{transform_indices = @transform_0, window_bounds = array<i64: 8, 16>}, {transform_indices = @transform_1, window_bounds = array<i64: 8, 128>}, {transform_indices = @transform_2, window_bounds = array<i64: 8, 16>}, {pipeline_mode = #tpu.pipeline_mode<synchronous>, transform_indices = @transform_3, window_bounds = array<i64: 16, 384>}, {pipeline_mode = #tpu.pipeline_mode<synchronous>, transform_indices = @transform_4, window_bounds = array<i64: 128, 256>}, {pipeline_mode = #tpu.pipeline_mode<synchronous>, transform_indices = @transform_5, window_bounds = array<i64: 128, 128>}, {pipeline_mode = #tpu.pipeline_mode<synchronous>, transform_indices = @transform_6, window_bounds = array<i64: 1, 256>}, {pipeline_mode = #tpu.pipeline_mode<synchronous>, transform_indices = @transform_7, window_bounds = array<i64: 1, 128>}, {transform_indices = @transform_8, window_bounds = array<i64: 8, 128>}]} {
    %c0 = arith.constant 0 : index
    %c0_0 = arith.constant 0 : index
    %0 = vector.load %arg1[%c0, %c0_0] : memref<8x16xf32, #tpu.memory_space<vmem>>, vector<8x16xf32>
    %c0_1 = arith.constant 0 : index
    %c0_2 = arith.constant 0 : index
    %1 = vector.load %arg2[%c0_1, %c0_2] : memref<8x128xf32, #tpu.memory_space<vmem>>, vector<8x128xf32>
    %c0_3 = arith.constant 0 : index
    %c0_4 = arith.constant 0 : index
    %2 = vector.load %arg3[%c0_3, %c0_4] : memref<8x16xf32, #tpu.memory_space<vmem>>, vector<8x16xf32>
    %c0_5 = arith.constant 0 : index
    %c0_6 = arith.constant 0 : index
    %3 = vector.load %arg4[%c0_5, %c0_6] : memref<16x384xf32, #tpu.memory_space<vmem>>, vector<16x384xf32>
    %c0_7 = arith.constant 0 : index
    %c0_8 = arith.constant 0 : index
    %4 = vector.load %arg5[%c0_7, %c0_8] : memref<128x256xf32, #tpu.memory_space<vmem>>, vector<128x256xf32>
    %c0_9 = arith.constant 0 : index
    %c0_10 = arith.constant 0 : index
    %5 = vector.load %arg6[%c0_9, %c0_10] : memref<128x128xf32, #tpu.memory_space<vmem>>, vector<128x128xf32>
    %c0_11 = arith.constant 0 : index
    %c0_12 = arith.constant 0 : index
    %6 = vector.load %arg7[%c0_11, %c0_12] : memref<1x256xf32, #tpu.memory_space<vmem>>, vector<1x256xf32>
    %c0_13 = arith.constant 0 : index
    %c0_14 = arith.constant 0 : index
    %7 = vector.load %arg8[%c0_13, %c0_14] : memref<1x128xf32, #tpu.memory_space<vmem>>, vector<1x128xf32>
    %8 = tpu.concatenate %0, %2 in 0 : vector<8x16xf32>, vector<8x16xf32> -> vector<16x16xf32>
    %cst = arith.constant dense<0.000000e+00> : vector<16x384xf32>
    %9 = tpu.matmul %8, %3, %cst {dimension_numbers = #tpu.dot_dimension_numbers<[1], [0], [0], [1], [0, 0, 1, 1], [], []>} : vector<16x16xf32>, vector<16x384xf32>, vector<16x384xf32> -> vector<16x384xf32>
    %10 = vector.extract_strided_slice %9 {offsets = [0, 256], sizes = [8, 128], strides = [1, 1]} : vector<16x384xf32> to vector<8x128xf32>
    %11 = vector.extract_strided_slice %9 {offsets = [8, 0], sizes = [8, 128], strides = [1, 1]} : vector<16x384xf32> to vector<8x128xf32>
    %12 = vector.extract_strided_slice %9 {offsets = [8, 128], sizes = [8, 128], strides = [1, 1]} : vector<16x384xf32> to vector<8x128xf32>
    %13 = vector.extract_strided_slice %9 {offsets = [8, 256], sizes = [8, 128], strides = [1, 1]} : vector<16x384xf32> to vector<8x128xf32>
    %14 = vector.extract_strided_slice %9 {offsets = [0, 0], sizes = [8, 256], strides = [1, 1]} : vector<16x384xf32> to vector<8x256xf32>
    %cst_15 = arith.constant dense<0.000000e+00> : vector<8x256xf32>
    %15 = tpu.matmul %1, %4, %cst_15 {dimension_numbers = #tpu.dot_dimension_numbers<[1], [0], [0], [1], [0, 0, 1, 1], [], []>} : vector<8x128xf32>, vector<128x256xf32>, vector<8x256xf32> -> vector<8x256xf32>
    %16 = arith.addf %14, %15 : vector<8x256xf32>
    %17 = vector.broadcast %6 : vector<1x256xf32> to vector<8x256xf32>
    %18 = arith.addf %16, %17 : vector<8x256xf32>
    %19 = arith.negf %18 : vector<8x256xf32>
    %20 = math.exp %19 : vector<8x256xf32>
    %cst_16 = arith.constant 1.000000e+00 : f32
    %21 = vector.broadcast %cst_16 : f32 to vector<8x256xf32>
    %22 = arith.addf %21, %20 : vector<8x256xf32>
    %23 = arith.divf %21, %22 : vector<8x256xf32>
    %24 = vector.extract_strided_slice %23 {offsets = [0, 0], sizes = [8, 128], strides = [1, 1]} : vector<8x256xf32> to vector<8x128xf32>
    %25 = vector.extract_strided_slice %23 {offsets = [0, 128], sizes = [8, 128], strides = [1, 1]} : vector<8x256xf32> to vector<8x128xf32>
    %26 = arith.mulf %24, %1 : vector<8x128xf32>
    %cst_17 = arith.constant dense<0.000000e+00> : vector<8x128xf32>
    %27 = tpu.matmul %26, %5, %cst_17 {dimension_numbers = #tpu.dot_dimension_numbers<[1], [0], [0], [1], [0, 0, 1, 1], [], []>} : vector<8x128xf32>, vector<128x128xf32>, vector<8x128xf32> -> vector<8x128xf32>
    %28 = arith.addf %10, %27 : vector<8x128xf32>
    %29 = vector.broadcast %7 : vector<1x128xf32> to vector<8x128xf32>
    %30 = arith.addf %28, %29 : vector<8x128xf32>
    %31 = math.tanh %30 : vector<8x128xf32>
    %32 = arith.subf %1, %31 : vector<8x128xf32>
    %cst_18 = arith.constant 1.000000e+00 : f32
    %33 = vector.broadcast %cst_18 : f32 to vector<8x128xf32>
    %34 = arith.subf %33, %25 : vector<8x128xf32>
    %35 = arith.subf %31, %1 : vector<8x128xf32>
    %36 = arith.mulf %34, %35 : vector<8x128xf32>
    %cst_19 = arith.constant dense<0.000000e+00> : vector<8x256xf32>
    %37 = tpu.matmul %36, %4, %cst_19 {dimension_numbers = #tpu.dot_dimension_numbers<[1], [0], [0], [1], [0, 0, 1, 1], [], []>} : vector<8x128xf32>, vector<128x256xf32>, vector<8x256xf32> -> vector<8x256xf32>
    %38 = vector.extract_strided_slice %37 {offsets = [0, 128], sizes = [8, 128], strides = [1, 1]} : vector<8x256xf32> to vector<8x128xf32>
    %39 = arith.addf %12, %38 : vector<8x128xf32>
    %40 = arith.mulf %25, %34 : vector<8x128xf32>
    %41 = arith.mulf %40, %39 : vector<8x128xf32>
    %cst_20 = arith.constant 1.000000e+00 : f32
    %42 = vector.broadcast %cst_20 : f32 to vector<8x128xf32>
    %43 = arith.subf %42, %24 : vector<8x128xf32>
    %44 = arith.mulf %24, %43 : vector<8x128xf32>
    %45 = vector.extract_strided_slice %37 {offsets = [0, 0], sizes = [8, 128], strides = [1, 1]} : vector<8x256xf32> to vector<8x128xf32>
    %46 = arith.addf %11, %45 : vector<8x128xf32>
    %47 = arith.mulf %44, %46 : vector<8x128xf32>
    %48 = tpu.concatenate %47, %24 in 0 : vector<8x128xf32>, vector<8x128xf32> -> vector<16x128xf32>
    %cst_21 = arith.constant dense<0.000000e+00> : vector<16x128xf32>
    %49 = tpu.matmul %48, %5, %cst_21 {dimension_numbers = #tpu.dot_dimension_numbers<[1], [0], [0], [1], [0, 0, 1, 1], [], []>} : vector<16x128xf32>, vector<128x128xf32>, vector<16x128xf32> -> vector<16x128xf32>
    %50 = vector.extract_strided_slice %49 {offsets = [0, 0], sizes = [8, 128], strides = [1, 1]} : vector<16x128xf32> to vector<8x128xf32>
    %51 = arith.mulf %50, %1 : vector<8x128xf32>
    %52 = arith.addf %13, %51 : vector<8x128xf32>
    %53 = vector.extract_strided_slice %49 {offsets = [8, 0], sizes = [8, 128], strides = [1, 1]} : vector<16x128xf32> to vector<8x128xf32>
    %54 = arith.mulf %53, %36 : vector<8x128xf32>
    %55 = arith.addf %52, %54 : vector<8x128xf32>
    %56 = arith.mulf %31, %31 : vector<8x128xf32>
    %cst_22 = arith.constant 1.000000e+00 : f32
    %57 = vector.broadcast %cst_22 : f32 to vector<8x128xf32>
    %58 = arith.subf %57, %56 : vector<8x128xf32>
    %59 = arith.mulf %58, %55 : vector<8x128xf32>
    %60 = arith.subf %36, %59 : vector<8x128xf32>
    %61 = arith.mulf %41, %32 : vector<8x128xf32>
    %62 = arith.mulf %25, %60 : vector<8x128xf32>
    %63 = arith.addf %61, %62 : vector<8x128xf32>
    %64 = arith.addf %63, %59 : vector<8x128xf32>
    %c0_23 = arith.constant 0 : index
    %c0_24 = arith.constant 0 : index
    %65 = vector.load %arg9[%c0_23, %c0_24] : memref<8x128xf32, #tpu.memory_space<vmem>>, vector<8x128xf32>
    tpu.vector_store %arg9[%c0_23, %c0_24], %64 {strides = array<i32>} : memref<8x128xf32, #tpu.memory_space<vmem>>, vector<8x128xf32>,
    return
  }
  func.func @transform_0(%arg0: i32) -> (i32, i32) {
    %c0_i32 = arith.constant 0 : i32
    %c0_i32_0 = arith.constant 0 : i32
    return %arg0, %c0_i32 : i32, i32
  }
  func.func @transform_1(%arg0: i32) -> (i32, i32) {
    %c0_i32 = arith.constant 0 : i32
    %c0_i32_0 = arith.constant 0 : i32
    return %arg0, %c0_i32 : i32, i32
  }
  func.func @transform_2(%arg0: i32) -> (i32, i32) {
    %c0_i32 = arith.constant 0 : i32
    %c0_i32_0 = arith.constant 0 : i32
    return %arg0, %c0_i32 : i32, i32
  }
  func.func @transform_3(%arg0: i32) -> (i32, i32) {
    %c0_i32 = arith.constant 0 : i32
    %c0_i32_0 = arith.constant 0 : i32
    %c0_i32_1 = arith.constant 0 : i32
    return %c0_i32, %c0_i32_0 : i32, i32
  }
  func.func @transform_4(%arg0: i32) -> (i32, i32) {
    %c0_i32 = arith.constant 0 : i32
    %c0_i32_0 = arith.constant 0 : i32
    %c0_i32_1 = arith.constant 0 : i32
    return %c0_i32, %c0_i32_0 : i32, i32
  }
  func.func @transform_5(%arg0: i32) -> (i32, i32) {
    %c0_i32 = arith.constant 0 : i32
    %c0_i32_0 = arith.constant 0 : i32
    %c0_i32_1 = arith.constant 0 : i32
    return %c0_i32, %c0_i32_0 : i32, i32
  }
  func.func @transform_6(%arg0: i32) -> (i32, i32) {
    %c0_i32 = arith.constant 0 : i32
    %c0_i32_0 = arith.constant 0 : i32
    %c0_i32_1 = arith.constant 0 : i32
    return %c0_i32, %c0_i32_0 : i32, i32
  }
  func.func @transform_7(%arg0: i32) -> (i32, i32) {
    %c0_i32 = arith.constant 0 : i32
    %c0_i32_0 = arith.constant 0 : i32
    %c0_i32_1 = arith.constant 0 : i32
    return %c0_i32, %c0_i32_0 : i32, i32
  }
  func.func @transform_8(%arg0: i32) -> (i32, i32) {
    %c0_i32 = arith.constant 0 : i32
    %c0_i32_0 = arith.constant 0 : i32
    return %arg0, %c0_i32 : i32, i32
  }
}

module attributes {stable_mosaic.version = 11 : i64} {
  func.func @cont_gru_delay_kernel(%arg0: i32, %arg1: memref<8x16xf32, #tpu.memory_space<vmem>>, %arg2: memref<8x128xf32, #tpu.memory_space<vmem>>, %arg3: memref<8x16xf32, #tpu.memory_space<vmem>>, %arg4: memref<16x384xf32, #tpu.memory_space<vmem>>, %arg5: memref<128x256xf32, #tpu.memory_space<vmem>>, %arg6: memref<128x128xf32, #tpu.memory_space<vmem>>, %arg7: memref<1x256xf32, #tpu.memory_space<vmem>>, %arg8: memref<1x128xf32, #tpu.memory_space<vmem>>, %arg9: memref<8x128xf32, #tpu.memory_space<vmem>>) attributes {dimension_semantics = [#tpu.dimension_semantics<parallel>], iteration_bounds = array<i64: 1>, scalar_prefetch = 0 : i64, scratch_operands = 0 : i64, tpu.core_type = #tpu.core_type<tc>, window_params = [{transform_indices = @transform_0, window_bounds = array<i64: 8, 16>}, {transform_indices = @transform_1, window_bounds = array<i64: 8, 128>}, {transform_indices = @transform_2, window_bounds = array<i64: 8, 16>}, {pipeline_mode = #tpu.pipeline_mode<synchronous>, transform_indices = @transform_3, window_bounds = array<i64: 16, 384>}, {pipeline_mode = #tpu.pipeline_mode<synchronous>, transform_indices = @transform_4, window_bounds = array<i64: 128, 256>}, {pipeline_mode = #tpu.pipeline_mode<synchronous>, transform_indices = @transform_5, window_bounds = array<i64: 128, 128>}, {pipeline_mode = #tpu.pipeline_mode<synchronous>, transform_indices = @transform_6, window_bounds = array<i64: 1, 256>}, {pipeline_mode = #tpu.pipeline_mode<synchronous>, transform_indices = @transform_7, window_bounds = array<i64: 1, 128>}, {transform_indices = @transform_8, window_bounds = array<i64: 8, 128>}]} {
    %c0 = arith.constant 0 : index
    %c0_0 = arith.constant 0 : index
    %0 = vector.load %arg1[%c0, %c0_0] : memref<8x16xf32, #tpu.memory_space<vmem>>, vector<8x16xf32>
    %c0_1 = arith.constant 0 : index
    %c0_2 = arith.constant 0 : index
    %1 = vector.load %arg2[%c0_1, %c0_2] : memref<8x128xf32, #tpu.memory_space<vmem>>, vector<8x128xf32>
    %c0_3 = arith.constant 0 : index
    %c0_4 = arith.constant 0 : index
    %2 = vector.load %arg3[%c0_3, %c0_4] : memref<8x16xf32, #tpu.memory_space<vmem>>, vector<8x16xf32>
    %c0_5 = arith.constant 0 : index
    %c0_6 = arith.constant 0 : index
    %3 = vector.load %arg4[%c0_5, %c0_6] : memref<16x384xf32, #tpu.memory_space<vmem>>, vector<16x384xf32>
    %c0_7 = arith.constant 0 : index
    %c0_8 = arith.constant 0 : index
    %4 = vector.load %arg5[%c0_7, %c0_8] : memref<128x256xf32, #tpu.memory_space<vmem>>, vector<128x256xf32>
    %c0_9 = arith.constant 0 : index
    %c0_10 = arith.constant 0 : index
    %5 = vector.load %arg6[%c0_9, %c0_10] : memref<128x128xf32, #tpu.memory_space<vmem>>, vector<128x128xf32>
    %c0_11 = arith.constant 0 : index
    %c0_12 = arith.constant 0 : index
    %6 = vector.load %arg7[%c0_11, %c0_12] : memref<1x256xf32, #tpu.memory_space<vmem>>, vector<1x256xf32>
    %c0_13 = arith.constant 0 : index
    %c0_14 = arith.constant 0 : index
    %7 = vector.load %arg8[%c0_13, %c0_14] : memref<1x128xf32, #tpu.memory_space<vmem>>, vector<1x128xf32>
    %8 = tpu.concatenate %0, %2 in 0 : vector<8x16xf32>, vector<8x16xf32> -> vector<16x16xf32>
    %cst = arith.constant dense<0.000000e+00> : vector<16x384xf32>
    %9 = tpu.matmul %8, %3, %cst {dimension_numbers = #tpu.dot_dimension_numbers<[1], [0], [0], [1], [0, 0, 1, 1], [], []>} : vector<16x16xf32>, vector<16x384xf32>, vector<16x384xf32> -> vector<16x384xf32>
    %10 = vector.extract_strided_slice %9 {offsets = [0, 256], sizes = [8, 128], strides = [1, 1]} : vector<16x384xf32> to vector<8x128xf32>
    %11 = vector.extract_strided_slice %9 {offsets = [8, 0], sizes = [8, 128], strides = [1, 1]} : vector<16x384xf32> to vector<8x128xf32>
    %12 = vector.extract_strided_slice %9 {offsets = [8, 128], sizes = [8, 128], strides = [1, 1]} : vector<16x384xf32> to vector<8x128xf32>
    %13 = vector.extract_strided_slice %9 {offsets = [8, 256], sizes = [8, 128], strides = [1, 1]} : vector<16x384xf32> to vector<8x128xf32>
    %14 = vector.extract_strided_slice %9 {offsets = [0, 0], sizes = [8, 256], strides = [1, 1]} : vector<16x384xf32> to vector<8x256xf32>
    %cst_15 = arith.constant dense<0.000000e+00> : vector<8x256xf32>
    %15 = tpu.matmul %1, %4, %cst_15 {dimension_numbers = #tpu.dot_dimension_numbers<[1], [0], [0], [1], [0, 0, 1, 1], [], []>} : vector<8x128xf32>, vector<128x256xf32>, vector<8x256xf32> -> vector<8x256xf32>
    %16 = arith.addf %14, %15 : vector<8x256xf32>
    %17 = vector.broadcast %6 : vector<1x256xf32> to vector<8x256xf32>
    %18 = arith.addf %16, %17 : vector<8x256xf32>
    %19 = arith.negf %18 : vector<8x256xf32>
    %20 = math.exp %19 : vector<8x256xf32>
    %cst_16 = arith.constant 1.000000e+00 : f32
    %21 = vector.broadcast %cst_16 : f32 to vector<8x256xf32>
    %22 = arith.addf %21, %20 : vector<8x256xf32>
    %23 = arith.divf %21, %22 : vector<8x256xf32>
    %24 = vector.extract_strided_slice %23 {offsets = [0, 0], sizes = [8, 128], strides = [1, 1]} : vector<8x256xf32> to vector<8x128xf32>
    %25 = vector.extract_strided_slice %23 {offsets = [0, 128], sizes = [8, 128], strides = [1, 1]} : vector<8x256xf32> to vector<8x128xf32>
    %26 = arith.mulf %24, %1 : vector<8x128xf32>
    %cst_17 = arith.constant dense<0.000000e+00> : vector<8x128xf32>
    %27 = tpu.matmul %26, %5, %cst_17 {dimension_numbers = #tpu.dot_dimension_numbers<[1], [0], [0], [1], [0, 0, 1, 1], [], []>} : vector<8x128xf32>, vector<128x128xf32>, vector<8x128xf32> -> vector<8x128xf32>
    %28 = arith.addf %10, %27 : vector<8x128xf32>
    %29 = vector.broadcast %7 : vector<1x128xf32> to vector<8x128xf32>
    %30 = arith.addf %28, %29 : vector<8x128xf32>
    %31 = math.tanh %30 : vector<8x128xf32>
    %32 = arith.subf %1, %31 : vector<8x128xf32>
    %cst_18 = arith.constant 1.000000e+00 : f32
    %33 = vector.broadcast %cst_18 : f32 to vector<8x128xf32>
    %34 = arith.subf %33, %25 : vector<8x128xf32>
    %35 = arith.subf %31, %1 : vector<8x128xf32>
    %36 = arith.mulf %34, %35 : vector<8x128xf32>
    %cst_19 = arith.constant dense<0.000000e+00> : vector<8x256xf32>
    %37 = tpu.matmul %36, %4, %cst_19 {dimension_numbers = #tpu.dot_dimension_numbers<[1], [0], [0], [1], [0, 0, 1, 1], [], []>} : vector<8x128xf32>, vector<128x256xf32>, vector<8x256xf32> -> vector<8x256xf32>
    %38 = vector.extract_strided_slice %37 {offsets = [0, 128], sizes = [8, 128], strides = [1, 1]} : vector<8x256xf32> to vector<8x128xf32>
    %39 = arith.addf %12, %38 : vector<8x128xf32>
    %40 = arith.mulf %25, %34 : vector<8x128xf32>
    %41 = arith.mulf %40, %39 : vector<8x128xf32>
    %cst_20 = arith.constant 1.000000e+00 : f32
    %42 = vector.broadcast %cst_20 : f32 to vector<8x128xf32>
    %43 = arith.subf %42, %24 : vector<8x128xf32>
    %44 = arith.mulf %24, %43 : vector<8x128xf32>
    %45 = vector.extract_strided_slice %37 {offsets = [0, 0], sizes = [8, 128], strides = [1, 1]} : vector<8x256xf32> to vector<8x128xf32>
    %46 = arith.addf %11, %45 : vector<8x128xf32>
    %47 = arith.mulf %44, %46 : vector<8x128xf32>
    %48 = tpu.concatenate %47, %24 in 0 : vector<8x128xf32>, vector<8x128xf32> -> vector<16x128xf32>
    %cst_21 = arith.constant dense<0.000000e+00> : vector<16x128xf32>
    %49 = tpu.matmul %48, %5, %cst_21 {dimension_numbers = #tpu.dot_dimension_numbers<[1], [0], [0], [1], [0, 0, 1, 1], [], []>} : vector<16x128xf32>, vector<128x128xf32>, vector<16x128xf32> -> vector<16x128xf32>
    %50 = vector.extract_strided_slice %49 {offsets = [0, 0], sizes = [8, 128], strides = [1, 1]} : vector<16x128xf32> to vector<8x128xf32>
    %51 = arith.mulf %50, %1 : vector<8x128xf32>
    %52 = arith.addf %13, %51 : vector<8x128xf32>
    %53 = vector.extract_strided_slice %49 {offsets = [8, 0], sizes = [8, 128], strides = [1, 1]} : vector<16x128xf32> to vector<8x128xf32>
    %54 = arith.mulf %53, %36 : vector<8x128xf32>
    %55 = arith.addf %52, %54 : vector<8x128xf32>
    %56 = arith.mulf %31, %31 : vector<8x128xf32>
    %cst_22 = arith.constant 1.000000e+00 : f32
    %57 = vector.broadcast %cst_22 : f32 to vector<8x128xf32>
    %58 = arith.subf %57, %56 : vector<8x128xf32>
    %59 = arith.mulf %58, %55 : vector<8x128xf32>
    %60 = arith.subf %36, %59 : vector<8x128xf32>
    %61 = arith.mulf %41, %32 : vector<8x128xf32>
    %62 = arith.mulf %25, %60 : vector<8x128xf32>
    %63 = arith.addf %61, %62 : vector<8x128xf32>
    %64 = arith.addf %63, %59 : vector<8x128xf32>
    %c0_23 = arith.constant 0 : index
    %c0_24 = arith.constant 0 : index
    %65 = vector.load %arg9[%c0_23, %c0_24] : memref<8x128xf32, #tpu.memory_space<vmem>>, vector<8x128xf32>
    tpu.vector_store %arg9[%c0_23, %c0_24], %64 {strides = array<i32>} : memref<8x128xf32, #tpu.memory_space<vmem>>, vector<8x128xf32>,
    return
  }
  func.func @transform_0(%arg0: i32) -> (i32, i32) {
    %c0_i32 = arith.constant 0 : i32
    %c0_i32_0 = arith.constant 0 : i32
    return %arg0, %c0_i32 : i32, i32
  }
  func.func @transform_1(%arg0: i32) -> (i32, i32) {
    %c0_i32 = arith.constant 0 : i32
    %c0_i32_0 = arith.constant 0 : i32
    return %arg0, %c0_i32 : i32, i32
  }
  func.func @transform_2(%arg0: i32) -> (i32, i32) {
    %c0_i32 = arith.constant 0 : i32
    %c0_i32_0 = arith.constant 0 : i32
    return %arg0, %c0_i32 : i32, i32
  }
  func.func @transform_3(%arg0: i32) -> (i32, i32) {
    %c0_i32 = arith.constant 0 : i32
    %c0_i32_0 = arith.constant 0 : i32
    %c0_i32_1 = arith.constant 0 : i32
    return %c0_i32, %c0_i32_0 : i32, i32
  }
  func.func @transform_4(%arg0: i32) -> (i32, i32) {
    %c0_i32 = arith.constant 0 : i32
    %c0_i32_0 = arith.constant 0 : i32
    %c0_i32_1 = arith.constant 0 : i32
    return %c0_i32, %c0_i32_0 : i32, i32
  }
  func.func @transform_5(%arg0: i32) -> (i32, i32) {
    %c0_i32 = arith.constant 0 : i32
    %c0_i32_0 = arith.constant 0 : i32
    %c0_i32_1 = arith.constant 0 : i32
    return %c0_i32, %c0_i32_0 : i32, i32
  }
  func.func @transform_6(%arg0: i32) -> (i32, i32) {
    %c0_i32 = arith.constant 0 : i32
    %c0_i32_0 = arith.constant 0 : i32
    %c0_i32_1 = arith.constant 0 : i32
    return %c0_i32, %c0_i32_0 : i32, i32
  }
  func.func @transform_7(%arg0: i32) -> (i32, i32) {
    %c0_i32 = arith.constant 0 : i32
    %c0_i32_0 = arith.constant 0 : i32
    %c0_i32_1 = arith.constant 0 : i32
    return %c0_i32, %c0_i32_0 : i32, i32
  }
  func.func @transform_8(%arg0: i32) -> (i32, i32) {
    %c0_i32 = arith.constant 0 : i32
    %c0_i32_0 = arith.constant 0 : i32
    return %arg0, %c0_i32 : i32, i32
  }
}

</mosaic_0001>

<llo_original>
// kernel: _cont_gru_delay_impl.1
$region0: #{_cont_gru_delay_impl.1}
  #allocation0 [shape = 'u32[]', space=smem, size = 0x4, offset = 0x4, fixed_abs, tag = 'smem constant byte address 0x4 - core index']
  #allocation1 [shape = 'u32[144,128]{1,0:T(1,128)}', space=vmem, size = 0x12000, scoped, tag = 'internal scratch']
  %s0 = inlined_call_operand.vmem [shape: f32[8,16], index: 0, kind: input, shape index: {}]
  %s1 = inlined_call_operand.vmem [shape: f32[8,128], index: 1, kind: input, shape index: {}]
  %s2 = inlined_call_operand.vmem [shape: f32[8,16], index: 2, kind: input, shape index: {}]
  %s3 = inlined_call_operand.hbm [shape: f32[16,384], index: 3, kind: input, shape index: {}]
  %s4 = inlined_call_operand.hbm [shape: f32[128,256], index: 4, kind: input, shape index: {}]
  %s5 = inlined_call_operand.hbm [shape: f32[128,128], index: 5, kind: input, shape index: {}]
  %s6 = inlined_call_operand.vmem [shape: f32[1,256], index: 6, kind: input, shape index: {}]
  %s7 = inlined_call_operand.vmem [shape: f32[1,128], index: 7, kind: input, shape index: {}]
  %s8 = inlined_call_operand.hbm [shape: f32[8,128], index: 8, kind: output, shape index: {}]
  %s9 = sld [smem:[#allocation0]]
  $region54: #{_cont_gru_delay_impl.1} parent=0
    _
  %s11 = ssub.s32 1, %s9
  %s12 = scalar_select 0, %s11, %s9
  $region1: #{_cont_gru_delay_impl.1} parent=0
    #allocation2 [shape = 'u8[24576]{0}', space=vmem, size = 0x6000, scoped, tag = 'input window, operand 3, single buffered']
    #allocation3 [shape = 's32[1]{0}', space=sflag, size = 0x4, scoped, tag = 'scoped memory for _cont_gru_delay_impl.1']
    #allocation4 [shape = 's32[1]{0}', space=sflag, size = 0x4, scoped, tag = 'scoped memory for _cont_gru_delay_impl.1']
    #allocation5 [shape = 'u8[131072]{0}', space=vmem, size = 0x20000, scoped, tag = 'input window, operand 4, single buffered']
    #allocation6 [shape = 's32[1]{0}', space=sflag, size = 0x4, scoped, tag = 'scoped memory for _cont_gru_delay_impl.1']
    #allocation7 [shape = 'u8[65536]{0}', space=vmem, size = 0x10000, scoped, tag = 'input window, operand 5, single buffered']
    #allocation8 [shape = 'u8[4096]{0}', space=vmem, size = 0x1000, scoped, tag = 'output window, operand 0, single buffered']
    %13 = vsyncpa [#allocation3], 0
    %14 = vsyncpa [#allocation6], 0
    %15 = vsyncpa [#allocation4], 0
    // Predicated region
    $region2: #{_cont_gru_delay_impl.1} parent=1 // pred_check
      _
    $region3: #{_cont_gru_delay_impl.1} parent=1 // pred_check_branch
      %17 = sbr.rel (0) target = $region5
    $region4: #{_cont_gru_delay_impl.1} parent=1 // pred_region
      _
    $region5: #{_cont_gru_delay_impl.1} parent=1 // pred_fallthru
      _
    // Predicated region
    $region6: #{_cont_gru_delay_impl.1} parent=1 // pred_check
      _
    $region7: #{_cont_gru_delay_impl.1} parent=1 // pred_check_branch
      %19 = sbr.rel (0) target = $region9
    $region8: #{_cont_gru_delay_impl.1} parent=1 // pred_region
      _
    $region9: #{_cont_gru_delay_impl.1} parent=1 // pred_fallthru
      _
    // Predicated region
    $region10: #{_cont_gru_delay_impl.1} parent=1 // pred_check
      _
    $region11: #{_cont_gru_delay_impl.1} parent=1 // pred_check_branch
      %21 = sbr.rel (0) target = $region13
    $region12: #{_cont_gru_delay_impl.1} parent=1 // pred_region
      _
    $region13: #{_cont_gru_delay_impl.1} parent=1 // pred_fallthru
      _
    // Predicated region
    $region14: #{_cont_gru_delay_impl.1} parent=1 // pred_check
      _
    $region15: #{_cont_gru_delay_impl.1} parent=1 // pred_check_branch
      %23 = sbr.rel (0) target = $region17
    $region16: #{_cont_gru_delay_impl.1} parent=1 // pred_region
      %s25 = ssub.s32 768, 768
      %26 = vsyncadd [#allocation3], %s25
      %s27 = sshll.u32 [#allocation2], 4
      %s28 = int_to_ptr.vmem [resolvable:$true] %s27
      %33 = dma.hbm_to_vmem [thread:$0]  %s3, 768, %s28, [#allocation3], 384, 384, 24
    $region17: #{_cont_gru_delay_impl.1} parent=1 // pred_fallthru
      _
    // Predicated region
    $region18: #{_cont_gru_delay_impl.1} parent=1 // pred_check
      _
    $region19: #{_cont_gru_delay_impl.1} parent=1 // pred_check_branch
      %35 = sbr.rel (0) target = $region21
    $region20: #{_cont_gru_delay_impl.1} parent=1 // pred_region
      %s37 = ssub.s32 4096, 4096
      %38 = vsyncadd [#allocation6], %s37
      %s39 = sshll.u32 [#allocation5], 4
      %s40 = int_to_ptr.vmem [resolvable:$true] %s39
      %45 = dma.hbm_to_vmem [thread:$0]  %s4, 4096, %s40, [#allocation6], 256, 256, 16
    $region21: #{_cont_gru_delay_impl.1} parent=1 // pred_fallthru
      _
    // Predicated region
    $region22: #{_cont_gru_delay_impl.1} parent=1 // pred_check
      _
    $region23: #{_cont_gru_delay_impl.1} parent=1 // pred_check_branch
      %47 = sbr.rel (0) target = $region25
    $region24: #{_cont_gru_delay_impl.1} parent=1 // pred_region
      %s49 = ssub.s32 2048, 2048
      %50 = vsyncadd [#allocation6], %s49
      %s51 = sshll.u32 [#allocation7], 4
      %s52 = int_to_ptr.vmem [resolvable:$true] %s51
      %57 = dma.hbm_to_vmem [thread:$0]  %s5, 2048, %s52, [#allocation6], 128, 128, 8
    $region25: #{_cont_gru_delay_impl.1} parent=1 // pred_fallthru
      _
    // Predicated region
    $region26: #{_cont_gru_delay_impl.1} parent=1 // pred_check
      _
    $region27: #{_cont_gru_delay_impl.1} parent=1 // pred_check_branch
      %59 = sbr.rel (0) target = $region29
    $region28: #{_cont_gru_delay_impl.1} parent=1 // pred_region
      _
    $region29: #{_cont_gru_delay_impl.1} parent=1 // pred_fallthru
      _
    // Predicated region
    $region30: #{_cont_gru_delay_impl.1} parent=1 // pred_check
      _
    $region31: #{_cont_gru_delay_impl.1} parent=1 // pred_check_branch
      %61 = sbr.rel (0) target = $region33
    $region32: #{_cont_gru_delay_impl.1} parent=1 // pred_region
      _
    $region33: #{_cont_gru_delay_impl.1} parent=1 // pred_fallthru
      _
    // Predicated region
    $region34: #{_cont_gru_delay_impl.1} parent=1 // pred_check
      _
    $region35: #{_cont_gru_delay_impl.1} parent=1 // pred_check_branch
      %63 = sbr.rel (0) target = $region37
    $region36: #{_cont_gru_delay_impl.1} parent=1 // pred_region
      %64 = dma.done [#allocation3], 768
    $region37: #{_cont_gru_delay_impl.1} parent=1 // pred_fallthru
      _
    // Predicated region
    $region38: #{_cont_gru_delay_impl.1} parent=1 // pred_check
      _
    $region39: #{_cont_gru_delay_impl.1} parent=1 // pred_check_branch
      %66 = sbr.rel (0) target = $region41
    $region40: #{_cont_gru_delay_impl.1} parent=1 // pred_region
      %67 = dma.done [#allocation6], 4096
    $region41: #{_cont_gru_delay_impl.1} parent=1 // pred_fallthru
      _
    // Predicated region
    $region42: #{_cont_gru_delay_impl.1} parent=1 // pred_check
      _
    $region43: #{_cont_gru_delay_impl.1} parent=1 // pred_check_branch
      %69 = sbr.rel (0) target = $region45
    $region44: #{_cont_gru_delay_impl.1} parent=1 // pred_region
      %70 = dma.done [#allocation6], 2048
    $region45: #{_cont_gru_delay_impl.1} parent=1 // pred_fallthru
      _
    %v71 = vld [vmem:[%s0] sm:$0xff]
    %v72 = vld [vmem:[%s1] sm:$0xff]
    %v73 = vld [vmem:[%s2] sm:$0xff]
    %v74 = vld [vmem:[#allocation2] sm:$0xff]
    %v75 = vld [vmem:[#allocation2 + $0x8] sm:$0xff]
    %v76 = vld [vmem:[#allocation2 + $0x10] sm:$0xff]
    %v77 = vld [vmem:[#allocation2 + $0x18] sm:$0xff]
    %v78 = vld [vmem:[#allocation2 + $0x20] sm:$0xff]
    %v79 = vld [vmem:[#allocation2 + $0x28] sm:$0xff]
    %v80 = vld [vmem:[#allocation5] sm:$0xff]
    %v81 = vld [vmem:[#allocation5 + $0x8] sm:$0xff]
    %v82 = vld [vmem:[#allocation5 + $0x10] sm:$0xff]
    %v83 = vld [vmem:[#allocation5 + $0x18] sm:$0xff]
    %v84 = vld [vmem:[#allocation5 + $0x20] sm:$0xff]
    %v85 = vld [vmem:[#allocation5 + $0x28] sm:$0xff]
    %v86 = vld [vmem:[#allocation5 + $0x30] sm:$0xff]
    %v87 = vld [vmem:[#allocation5 + $0x38] sm:$0xff]
    %v88 = vld [vmem:[#allocation5 + $0x40] sm:$0xff]
    %v89 = vld [vmem:[#allocation5 + $0x48] sm:$0xff]
    %v90 = vld [vmem:[#allocation5 + $0x50] sm:$0xff]
    %v91 = vld [vmem:[#allocation5 + $0x58] sm:$0xff]
    %v92 = vld [vmem:[#allocation5 + $0x60] sm:$0xff]
    %v93 = vld [vmem:[#allocation5 + $0x68] sm:$0xff]
    %v94 = vld [vmem:[#allocation5 + $0x70] sm:$0xff]
    %v95 = vld [vmem:[#allocation5 + $0x78] sm:$0xff]
    %v96 = vld [vmem:[#allocation5 + $0x80] sm:$0xff]
    %v97 = vld [vmem:[#allocation5 + $0x88] sm:$0xff]
    %v98 = vld [vmem:[#allocation5 + $0x90] sm:$0xff]
    %v99 = vld [vmem:[#allocation5 + $0x98] sm:$0xff]
    %v100 = vld [vmem:[#allocation5 + $0xa0] sm:$0xff]
    %v101 = vld [vmem:[#allocation5 + $0xa8] sm:$0xff]
    %v102 = vld [vmem:[#allocation5 + $0xb0] sm:$0xff]
    %v103 = vld [vmem:[#allocation5 + $0xb8] sm:$0xff]
    %v104 = vld [vmem:[#allocation5 + $0xc0] sm:$0xff]
    %v105 = vld [vmem:[#allocation5 + $0xc8] sm:$0xff]
    %v106 = vld [vmem:[#allocation5 + $0xd0] sm:$0xff]
    %v107 = vld [vmem:[#allocation5 + $0xd8] sm:$0xff]
    %v108 = vld [vmem:[#allocation5 + $0xe0] sm:$0xff]
    %v109 = vld [vmem:[#allocation5 + $0xe8] sm:$0xff]
    %v110 = vld [vmem:[#allocation5 + $0xf0] sm:$0xff]
    %v111 = vld [vmem:[#allocation5 + $0xf8] sm:$0xff]
    %v112 = vld [vmem:[#allocation7] sm:$0xff]
    %v113 = vld [vmem:[#allocation7 + $0x8] sm:$0xff]
    %v114 = vld [vmem:[#allocation7 + $0x10] sm:$0xff]
    %v115 = vld [vmem:[#allocation7 + $0x18] sm:$0xff]
    %v116 = vld [vmem:[#allocation7 + $0x20] sm:$0xff]
    %v117 = vld [vmem:[#allocation7 + $0x28] sm:$0xff]
    %v118 = vld [vmem:[#allocation7 + $0x30] sm:$0xff]
    %v119 = vld [vmem:[#allocation7 + $0x38] sm:$0xff]
    %v120 = vld [vmem:[#allocation7 + $0x40] sm:$0xff]
    %v121 = vld [vmem:[#allocation7 + $0x48] sm:$0xff]
    %v122 = vld [vmem:[#allocation7 + $0x50] sm:$0xff]
    %v123 = vld [vmem:[#allocation7 + $0x58] sm:$0xff]
    %v124 = vld [vmem:[#allocation7 + $0x60] sm:$0xff]
    %v125 = vld [vmem:[#allocation7 + $0x68] sm:$0xff]
    %v126 = vld [vmem:[#allocation7 + $0x70] sm:$0xff]
    %v127 = vld [vmem:[#allocation7 + $0x78] sm:$0xff]
    %v128 = vld [vmem:[%s6] sm:$0x3]
    %v129 = vld [vmem:[%s7] sm:$0x1]
    %vm130 = vcmask 130048
    %v132 = vsel %vm130, %v71, 0
    %v135 = vsel %vm130, %v73, 0
    %137 = vmatprep.subr.mxu0 %v75
    %138 = vmatpush1.msra.mxu0 %v74
    %139 = vmatprep.subr.mxu0 %v78
    %140 = vmatpush1.msra.mxu0 %v77
    %141 = vmatprep.subr.mxu0 0.0
    %142 = vmatpush1.msra.mxu0 0.0
    %143 = vmatprep.subr.mxu0 0.0
    %144 = vmatpush1.msra.mxu0 0.0
    %145 = vmatprep.subr.mxu0 0.0
    %146 = vmatpush1.msra.mxu0 0.0
    %147 = vmatprep.subr.mxu0 0.0
    %148 = vmatpush1.msra.mxu0 0.0
    %149 = vmatprep.subr.mxu0 0.0
    %150 = vmatpush1.msra.mxu0 0.0
    %151 = vmatprep.subr.mxu0 0.0
    %152 = vmatpush1.msra.mxu0 0.0
    %153 = vmatprep.subr.mxu0 0.0
    %154 = vmatpush1.msra.mxu0 0.0
    %155 = vmatprep.subr.mxu0 0.0
    %156 = vmatpush1.msra.mxu0 0.0
    %157 = vmatprep.subr.mxu0 0.0
    %158 = vmatpush1.msra.mxu0 0.0
    %159 = vmatprep.subr.mxu0 0.0
    %160 = vmatpush1.msra.mxu0 0.0
    %161 = vmatprep.subr.mxu0 0.0
    %162 = vmatpush1.msra.mxu0 0.0
    %163 = vmatprep.subr.mxu0 0.0
    %164 = vmatpush1.msra.mxu0 0.0
    %165 = vmatprep.subr.mxu0 0.0
    %166 = vmatpush1.msra.mxu0 0.0
    %167 = vmatprep.subr.mxu0 0.0
    %168 = vmatpush1.msra.mxu0 0.0
    %169 = vmatprep.subr.mxu0 0.0
    %170 = vmatpush1.msra.mxu0 0.0
    %171 = vmatprep.subr.mxu0 0.0
    %172 = vmatpush1.msra.mxu0 0.0
    %173 = vmatprep.subr.mxu0 0.0
    %174 = vmatpush1.msra.mxu0 0.0
    %175 = vmatprep.subr.mxu0 0.0
    %176 = vmatpush1.msra.mxu0 0.0
    %177 = vmatprep.subr.mxu0 0.0
    %178 = vmatpush1.msra.mxu0 0.0
    %179 = vmatprep.subr.mxu0 0.0
    %180 = vmatpush1.msra.mxu0 0.0
    %181 = vmatprep.subr.mxu0 0.0
    %182 = vmatpush1.msra.mxu0 0.0
    %183 = vmatprep.subr.mxu0 0.0
    %184 = vmatpush1.msra.mxu0 0.0
    %185 = vmatprep.subr.mxu0 0.0
    %186 = vmatpush1.msra.mxu0 0.0
    %187 = vmatprep.subr.mxu0 0.0
    %188 = vmatpush1.msra.mxu0 0.0
    %189 = vmatprep.subr.mxu0 0.0
    %190 = vmatpush1.msra.mxu0 0.0
    %191 = vmatprep.subr.mxu0 0.0
    %192 = vmatpush1.msra.mxu0 0.0
    %193 = vmatprep.subr.mxu0 0.0
    %194 = vmatpush1.msra.mxu0 0.0
    %195 = vmatprep.subr.mxu0 0.0
    %196 = vmatpush1.msra.mxu0 0.0
    %197 = vmatprep.subr.mxu0 0.0
    %198 = vmatpush1.msra.mxu0 0.0
    %199 = vmatprep.subr.mxu0 0.0
    %200 = vmatpush1.msra.mxu0 0.0
    %201 = vmatprep.mubr.f32.mxu0 0.0
    %202 = vmatmul.mubr.f32.gmra.mrb[0].mxu0 %v132
    %v203 = vpop.f32.mrb[0].mxu0
    %v204 = vadd.f32 0.0, %v203
    %v205 = vpop.f32.mrb[0].mxu0
    %v206 = vadd.f32 0.0, %v205
    %207 = vmatprep.mubr.f32.mxu0 0.0
    %208 = vmatmul.mubr.f32.gmra.mrb[0].mxu0 %v135
    %v209 = vpop.f32.mrb[0].mxu0
    %v210 = vadd.f32 0.0, %v209
    %v211 = vpop.f32.mrb[0].mxu0
    %v212 = vadd.f32 0.0, %v211
    %213 = vdwg.mxu0
    %214 = vmatprep.subr.mxu0 0.0
    %215 = vmatpush1.msra.mxu0 %v76
    %216 = vmatprep.subr.mxu0 0.0
    %217 = vmatpush1.msra.mxu0 %v79
    %218 = vmatprep.subr.mxu0 0.0
    %219 = vmatpush1.msra.mxu0 0.0
    %220 = vmatprep.subr.mxu0 0.0
    %221 = vmatpush1.msra.mxu0 0.0
    %222 = vmatprep.subr.mxu0 0.0
    %223 = vmatpush1.msra.mxu0 0.0
    %224 = vmatprep.subr.mxu0 0.0
    %225 = vmatpush1.msra.mxu0 0.0
    %226 = vmatprep.subr.mxu0 0.0
    %227 = vmatpush1.msra.mxu0 0.0
    %228 = vmatprep.subr.mxu0 0.0
    %229 = vmatpush1.msra.mxu0 0.0
    %230 = vmatprep.subr.mxu0 0.0
    %231 = vmatpush1.msra.mxu0 0.0
    %232 = vmatprep.subr.mxu0 0.0
    %233 = vmatpush1.msra.mxu0 0.0
    %234 = vmatprep.subr.mxu0 0.0
    %235 = vmatpush1.msra.mxu0 0.0
    %236 = vmatprep.subr.mxu0 0.0
    %237 = vmatpush1.msra.mxu0 0.0
    %238 = vmatprep.subr.mxu0 0.0
    %239 = vmatpush1.msra.mxu0 0.0
    %240 = vmatprep.subr.mxu0 0.0
    %241 = vmatpush1.msra.mxu0 0.0
    %242 = vmatprep.subr.mxu0 0.0
    %243 = vmatpush1.msra.mxu0 0.0
    %244 = vmatprep.subr.mxu0 0.0
    %245 = vmatpush1.msra.mxu0 0.0
    %246 = vmatprep.subr.mxu0 0.0
    %247 = vmatpush1.msra.mxu0 0.0
    %248 = vmatprep.subr.mxu0 0.0
    %249 = vmatpush1.msra.mxu0 0.0
    %250 = vmatprep.subr.mxu0 0.0
    %251 = vmatpush1.msra.mxu0 0.0
    %252 = vmatprep.subr.mxu0 0.0
    %253 = vmatpush1.msra.mxu0 0.0
    %254 = vmatprep.subr.mxu0 0.0
    %255 = vmatpush1.msra.mxu0 0.0
    %256 = vmatprep.subr.mxu0 0.0
    %257 = vmatpush1.msra.mxu0 0.0
    %258 = vmatprep.subr.mxu0 0.0
    %259 = vmatpush1.msra.mxu0 0.0
    %260 = vmatprep.subr.mxu0 0.0
    %261 = vmatpush1.msra.mxu0 0.0
    %262 = vmatprep.subr.mxu0 0.0
    %263 = vmatpush1.msra.mxu0 0.0
    %264 = vmatprep.subr.mxu0 0.0
    %265 = vmatpush1.msra.mxu0 0.0
    %266 = vmatprep.subr.mxu0 0.0
    %267 = vmatpush1.msra.mxu0 0.0
    %268 = vmatprep.subr.mxu0 0.0
    %269 = vmatpush1.msra.mxu0 0.0
    %270 = vmatprep.subr.mxu0 0.0
    %271 = vmatpush1.msra.mxu0 0.0
    %272 = vmatprep.subr.mxu0 0.0
    %273 = vmatpush1.msra.mxu0 0.0
    %274 = vmatprep.subr.mxu0 0.0
    %275 = vmatpush1.msra.mxu0 0.0
    %276 = vmatprep.subr.mxu0 0.0
    %277 = vmatpush1.msra.mxu0 0.0
    %278 = vmatprep.mubr.f32.mxu0 0.0
    %279 = vmatmul.mubr.f32.gmra.mrb[0].mxu0 %v132
    %v280 = vpop.f32.mrb[0].mxu0
    %v281 = vadd.f32 0.0, %v280
    %v282 = vpop.f32.mrb[0].mxu0
    %283 = vmatprep.mubr.f32.mxu0 0.0
    %284 = vmatmul.mubr.f32.gmra.mrb[0].mxu0 %v135
    %v285 = vpop.f32.mrb[0].mxu0
    %v286 = vadd.f32 0.0, %v285
    %v287 = vpop.f32.mrb[0].mxu0
    %288 = vdwg.mxu0
    %289 = vmatprep.subr.mxu0 %v81
    %290 = vmatpush1.msra.mxu0 %v80
    %291 = vmatprep.subr.mxu0 %v83
    %292 = vmatpush1.msra.mxu0 %v82
    %293 = vmatprep.subr.mxu0 %v85
    %294 = vmatpush1.msra.mxu0 %v84
    %295 = vmatprep.subr.mxu0 %v87
    %296 = vmatpush1.msra.mxu0 %v86
    %297 = vmatprep.subr.mxu0 %v89
    %298 = vmatpush1.msra.mxu0 %v88
    %299 = vmatprep.subr.mxu0 %v91
    %300 = vmatpush1.msra.mxu0 %v90
    %301 = vmatprep.subr.mxu0 %v93
    %302 = vmatpush1.msra.mxu0 %v92
    %303 = vmatprep.subr.mxu0 %v95
    %304 = vmatpush1.msra.mxu0 %v94
    %305 = vmatprep.subr.mxu0 %v97
    %306 = vmatpush1.msra.mxu0 %v96
    %307 = vmatprep.subr.mxu0 %v99
    %308 = vmatpush1.msra.mxu0 %v98
    %309 = vmatprep.subr.mxu0 %v101
    %310 = vmatpush1.msra.mxu0 %v100
    %311 = vmatprep.subr.mxu0 %v103
    %312 = vmatpush1.msra.mxu0 %v102
    %313 = vmatprep.subr.mxu0 %v105
    %314 = vmatpush1.msra.mxu0 %v104
    %315 = vmatprep.subr.mxu0 %v107
    %316 = vmatpush1.msra.mxu0 %v106
    %317 = vmatprep.subr.mxu0 %v109
    %318 = vmatpush1.msra.mxu0 %v108
    %319 = vmatprep.subr.mxu0 %v111
    %320 = vmatpush1.msra.mxu0 %v110
    %321 = vmatprep.subr.mxu0 0.0
    %322 = vmatpush1.msra.mxu0 0.0
    %323 = vmatprep.subr.mxu0 0.0
    %324 = vmatpush1.msra.mxu0 0.0
    %325 = vmatprep.subr.mxu0 0.0
    %326 = vmatpush1.msra.mxu0 0.0
    %327 = vmatprep.subr.mxu0 0.0
    %328 = vmatpush1.msra.mxu0 0.0
    %329 = vmatprep.subr.mxu0 0.0
    %330 = vmatpush1.msra.mxu0 0.0
    %331 = vmatprep.subr.mxu0 0.0
    %332 = vmatpush1.msra.mxu0 0.0
    %333 = vmatprep.subr.mxu0 0.0
    %334 = vmatpush1.msra.mxu0 0.0
    %335 = vmatprep.subr.mxu0 0.0
    %336 = vmatpush1.msra.mxu0 0.0
    %337 = vmatprep.subr.mxu0 0.0
    %338 = vmatpush1.msra.mxu0 0.0
    %339 = vmatprep.subr.mxu0 0.0
    %340 = vmatpush1.msra.mxu0 0.0
    %341 = vmatprep.subr.mxu0 0.0
    %342 = vmatpush1.msra.mxu0 0.0
    %343 = vmatprep.subr.mxu0 0.0
    %344 = vmatpush1.msra.mxu0 0.0
    %345 = vmatprep.subr.mxu0 0.0
    %346 = vmatpush1.msra.mxu0 0.0
    %347 = vmatprep.subr.mxu0 0.0
    %348 = vmatpush1.msra.mxu0 0.0
    %349 = vmatprep.subr.mxu0 0.0
    %350 = vmatpush1.msra.mxu0 0.0
    %351 = vmatprep.subr.mxu0 0.0
    %352 = vmatpush1.msra.mxu0 0.0
    %353 = vmatprep.mubr.f32.mxu0 0.0
    %354 = vmatmul.mubr.f32.gmra.mrb[0].mxu0 %v72
    %v355 = vpop.f32.mrb[0].mxu0
    %v356 = vadd.f32 0.0, %v355
    %v357 = vpop.f32.mrb[0].mxu0
    %v358 = vadd.f32 0.0, %v357
    %359 = vdwg.mxu0
    %v360 = vadd.f32 %v204, %v356
    %v361 = vadd.f32 %v206, %v358
    %v363 = vlaneseq
    %v364 = vshrl.u32 %v363, 7
    %v365 = vsub.s32 0, %v364
    %v366 = vrot.slane %v128, %v365
    %v367 = vlaneseq
    %v368 = vshrl.u32 %v367, 7
    %v369 = vsub.s32 1, %v368
    %v370 = vrot.slane %v128, %v369
    %v373 = vadd.f32 %v360, %v366
    %v374 = vadd.f32 %v361, %v370
    %v375 = vxor.u32 %v373, 2147483648
    %v376 = vxor.u32 %v374, 2147483648
    %v377 = vmul.f32 %v375, 1.442695
    %v378 = vpow.pop %v377
    %v379 = vmul.f32 %v376, 1.442695
    %v380 = vpow.pop %v379
    %v381 = vadd.f32 %v378, 1.0
    %v382 = vadd.f32 %v380, 1.0
    %v383 = vrcp.pop %v381
    %v384 = vmul.f32 1.0, %v383
    %v385 = vrcp.pop %v382
    %v386 = vmul.f32 1.0, %v385
    %v387 = vmul.f32 %v384, %v72
    %388 = vmatprep.subr.mxu0 0.0
    %389 = vmatpush1.msra.mxu0 %v112
    %390 = vmatprep.subr.mxu0 0.0
    %391 = vmatpush1.msra.mxu0 %v113
    %392 = vmatprep.subr.mxu0 0.0
    %393 = vmatpush1.msra.mxu0 %v114
    %394 = vmatprep.subr.mxu0 0.0
    %395 = vmatpush1.msra.mxu0 %v115
    %396 = vmatprep.subr.mxu0 0.0
    %397 = vmatpush1.msra.mxu0 %v116
    %398 = vmatprep.subr.mxu0 0.0
    %399 = vmatpush1.msra.mxu0 %v117
    %400 = vmatprep.subr.mxu0 0.0
    %401 = vmatpush1.msra.mxu0 %v118
    %402 = vmatprep.subr.mxu0 0.0
    %403 = vmatpush1.msra.mxu0 %v119
    %404 = vmatprep.subr.mxu0 0.0
    %405 = vmatpush1.msra.mxu0 %v120
    %406 = vmatprep.subr.mxu0 0.0
    %407 = vmatpush1.msra.mxu0 %v121
    %408 = vmatprep.subr.mxu0 0.0
    %409 = vmatpush1.msra.mxu0 %v122
    %410 = vmatprep.subr.mxu0 0.0
    %411 = vmatpush1.msra.mxu0 %v123
    %412 = vmatprep.subr.mxu0 0.0
    %413 = vmatpush1.msra.mxu0 %v124
    %414 = vmatprep.subr.mxu0 0.0
    %415 = vmatpush1.msra.mxu0 %v125
    %416 = vmatprep.subr.mxu0 0.0
    %417 = vmatpush1.msra.mxu0 %v126
    %418 = vmatprep.subr.mxu0 0.0
    %419 = vmatpush1.msra.mxu0 %v127
    %420 = vmatprep.subr.mxu0 0.0
    %421 = vmatpush1.msra.mxu0 0.0
    %422 = vmatprep.subr.mxu0 0.0
    %423 = vmatpush1.msra.mxu0 0.0
    %424 = vmatprep.subr.mxu0 0.0
    %425 = vmatpush1.msra.mxu0 0.0
    %426 = vmatprep.subr.mxu0 0.0
    %427 = vmatpush1.msra.mxu0 0.0
    %428 = vmatprep.subr.mxu0 0.0
    %429 = vmatpush1.msra.mxu0 0.0
    %430 = vmatprep.subr.mxu0 0.0
    %431 = vmatpush1.msra.mxu0 0.0
    %432 = vmatprep.subr.mxu0 0.0
    %433 = vmatpush1.msra.mxu0 0.0
    %434 = vmatprep.subr.mxu0 0.0
    %435 = vmatpush1.msra.mxu0 0.0
    %436 = vmatprep.subr.mxu0 0.0
    %437 = vmatpush1.msra.mxu0 0.0
    %438 = vmatprep.subr.mxu0 0.0
    %439 = vmatpush1.msra.mxu0 0.0
    %440 = vmatprep.subr.mxu0 0.0
    %441 = vmatpush1.msra.mxu0 0.0
    %442 = vmatprep.subr.mxu0 0.0
    %443 = vmatpush1.msra.mxu0 0.0
    %444 = vmatprep.subr.mxu0 0.0
    %445 = vmatpush1.msra.mxu0 0.0
    %446 = vmatprep.subr.mxu0 0.0
    %447 = vmatpush1.msra.mxu0 0.0
    %448 = vmatprep.subr.mxu0 0.0
    %449 = vmatpush1.msra.mxu0 0.0
    %450 = vmatprep.subr.mxu0 0.0
    %451 = vmatpush1.msra.mxu0 0.0
    %452 = vmatprep.mubr.f32.mxu0 0.0
    %453 = vmatmul.mubr.f32.gmra.mrb[0].mxu0 %v387
    %v454 = vpop.f32.mrb[0].mxu0
    %v455 = vadd.f32 0.0, %v454
    %v456 = vpop.f32.mrb[0].mxu0
    %457 = vdwg.mxu0
    %v458 = vadd.f32 %v281, %v455
    %v460 = vlaneseq
    %v461 = vshrl.u32 %v460, 7
    %v462 = vsub.s32 0, %v461
    %v463 = vrot.slane %v129, %v462
    %v465 = vadd.f32 %v458, %v463
    %v466 = vtanh.pop %v465
    %v467 = vsub.f32 %v72, %v466
    %v468 = vsub.f32 1.0, %v386
    %v469 = vsub.f32 %v466, %v72
    %v470 = vmul.f32 %v468, %v469
    %471 = vmatprep.subr.mxu0 %v81
    %472 = vmatpush1.msra.mxu0 %v80
    %473 = vmatprep.subr.mxu0 %v83
    %474 = vmatpush1.msra.mxu0 %v82
    %475 = vmatprep.subr.mxu0 %v85
    %476 = vmatpush1.msra.mxu0 %v84
    %477 = vmatprep.subr.mxu0 %v87
    %478 = vmatpush1.msra.mxu0 %v86
    %479 = vmatprep.subr.mxu0 %v89
    %480 = vmatpush1.msra.mxu0 %v88
    %481 = vmatprep.subr.mxu0 %v91
    %482 = vmatpush1.msra.mxu0 %v90
    %483 = vmatprep.subr.mxu0 %v93
    %484 = vmatpush1.msra.mxu0 %v92
    %485 = vmatprep.subr.mxu0 %v95
    %486 = vmatpush1.msra.mxu0 %v94
    %487 = vmatprep.subr.mxu0 %v97
    %488 = vmatpush1.msra.mxu0 %v96
    %489 = vmatprep.subr.mxu0 %v99
    %490 = vmatpush1.msra.mxu0 %v98
    %491 = vmatprep.subr.mxu0 %v101
    %492 = vmatpush1.msra.mxu0 %v100
    %493 = vmatprep.subr.mxu0 %v103
    %494 = vmatpush1.msra.mxu0 %v102
    %495 = vmatprep.subr.mxu0 %v105
    %496 = vmatpush1.msra.mxu0 %v104
    %497 = vmatprep.subr.mxu0 %v107
    %498 = vmatpush1.msra.mxu0 %v106
    %499 = vmatprep.subr.mxu0 %v109
    %500 = vmatpush1.msra.mxu0 %v108
    %501 = vmatprep.subr.mxu0 %v111
    %502 = vmatpush1.msra.mxu0 %v110
    %503 = vmatprep.subr.mxu0 0.0
    %504 = vmatpush1.msra.mxu0 0.0
    %505 = vmatprep.subr.mxu0 0.0
    %506 = vmatpush1.msra.mxu0 0.0
    %507 = vmatprep.subr.mxu0 0.0
    %508 = vmatpush1.msra.mxu0 0.0
    %509 = vmatprep.subr.mxu0 0.0
    %510 = vmatpush1.msra.mxu0 0.0
    %511 = vmatprep.subr.mxu0 0.0
    %512 = vmatpush1.msra.mxu0 0.0
    %513 = vmatprep.subr.mxu0 0.0
    %514 = vmatpush1.msra.mxu0 0.0
    %515 = vmatprep.subr.mxu0 0.0
    %516 = vmatpush1.msra.mxu0 0.0
    %517 = vmatprep.subr.mxu0 0.0
    %518 = vmatpush1.msra.mxu0 0.0
    %519 = vmatprep.subr.mxu0 0.0
    %520 = vmatpush1.msra.mxu0 0.0
    %521 = vmatprep.subr.mxu0 0.0
    %522 = vmatpush1.msra.mxu0 0.0
    %523 = vmatprep.subr.mxu0 0.0
    %524 = vmatpush1.msra.mxu0 0.0
    %525 = vmatprep.subr.mxu0 0.0
    %526 = vmatpush1.msra.mxu0 0.0
    %527 = vmatprep.subr.mxu0 0.0
    %528 = vmatpush1.msra.mxu0 0.0
    %529 = vmatprep.subr.mxu0 0.0
    %530 = vmatpush1.msra.mxu0 0.0
    %531 = vmatprep.subr.mxu0 0.0
    %532 = vmatpush1.msra.mxu0 0.0
    %533 = vmatprep.subr.mxu0 0.0
    %534 = vmatpush1.msra.mxu0 0.0
    %535 = vmatprep.mubr.f32.mxu0 0.0
    %536 = vmatmul.mubr.f32.gmra.mrb[0].mxu0 %v470
    %v537 = vpop.f32.mrb[0].mxu0
    %v538 = vadd.f32 0.0, %v537
    %v539 = vpop.f32.mrb[0].mxu0
    %v540 = vadd.f32 0.0, %v539
    %541 = vdwg.mxu0
    %v542 = vadd.f32 %v212, %v540
    %v543 = vmul.f32 %v386, %v468
    %v544 = vmul.f32 %v543, %v542
    %v545 = vsub.f32 1.0, %v384
    %v546 = vmul.f32 %v384, %v545
    %v547 = vadd.f32 %v210, %v538
    %v548 = vmul.f32 %v546, %v547
    %549 = vmatprep.subr.mxu0 0.0
    %550 = vmatpush1.msra.mxu0 %v112
    %551 = vmatprep.subr.mxu0 0.0
    %552 = vmatpush1.msra.mxu0 %v113
    %553 = vmatprep.subr.mxu0 0.0
    %554 = vmatpush1.msra.mxu0 %v114
    %555 = vmatprep.subr.mxu0 0.0
    %556 = vmatpush1.msra.mxu0 %v115
    %557 = vmatprep.subr.mxu0 0.0
    %558 = vmatpush1.msra.mxu0 %v116
    %559 = vmatprep.subr.mxu0 0.0
    %560 = vmatpush1.msra.mxu0 %v117
    %561 = vmatprep.subr.mxu0 0.0
    %562 = vmatpush1.msra.mxu0 %v118
    %563 = vmatprep.subr.mxu0 0.0
    %564 = vmatpush1.msra.mxu0 %v119
    %565 = vmatprep.subr.mxu0 0.0
    %566 = vmatpush1.msra.mxu0 %v120
    %567 = vmatprep.subr.mxu0 0.0
    %568 = vmatpush1.msra.mxu0 %v121
    %569 = vmatprep.subr.mxu0 0.0
    %570 = vmatpush1.msra.mxu0 %v122
    %571 = vmatprep.subr.mxu0 0.0
    %572 = vmatpush1.msra.mxu0 %v123
    %573 = vmatprep.subr.mxu0 0.0
    %574 = vmatpush1.msra.mxu0 %v124
    %575 = vmatprep.subr.mxu0 0.0
    %576 = vmatpush1.msra.mxu0 %v125
    %577 = vmatprep.subr.mxu0 0.0
    %578 = vmatpush1.msra.mxu0 %v126
    %579 = vmatprep.subr.mxu0 0.0
    %580 = vmatpush1.msra.mxu0 %v127
    %581 = vmatprep.subr.mxu0 0.0
    %582 = vmatpush1.msra.mxu0 0.0
    %583 = vmatprep.subr.mxu0 0.0
    %584 = vmatpush1.msra.mxu0 0.0
    %585 = vmatprep.subr.mxu0 0.0
    %586 = vmatpush1.msra.mxu0 0.0
    %587 = vmatprep.subr.mxu0 0.0
    %588 = vmatpush1.msra.mxu0 0.0
    %589 = vmatprep.subr.mxu0 0.0
    %590 = vmatpush1.msra.mxu0 0.0
    %591 = vmatprep.subr.mxu0 0.0
    %592 = vmatpush1.msra.mxu0 0.0
    %593 = vmatprep.subr.mxu0 0.0
    %594 = vmatpush1.msra.mxu0 0.0
    %595 = vmatprep.subr.mxu0 0.0
    %596 = vmatpush1.msra.mxu0 0.0
    %597 = vmatprep.subr.mxu0 0.0
    %598 = vmatpush1.msra.mxu0 0.0
    %599 = vmatprep.subr.mxu0 0.0
    %600 = vmatpush1.msra.mxu0 0.0
    %601 = vmatprep.subr.mxu0 0.0
    %602 = vmatpush1.msra.mxu0 0.0
    %603 = vmatprep.subr.mxu0 0.0
    %604 = vmatpush1.msra.mxu0 0.0
    %605 = vmatprep.subr.mxu0 0.0
    %606 = vmatpush1.msra.mxu0 0.0
    %607 = vmatprep.subr.mxu0 0.0
    %608 = vmatpush1.msra.mxu0 0.0
    %609 = vmatprep.subr.mxu0 0.0
    %610 = vmatpush1.msra.mxu0 0.0
    %611 = vmatprep.subr.mxu0 0.0
    %612 = vmatpush1.msra.mxu0 0.0
    %613 = vmatprep.mubr.f32.mxu0 0.0
    %614 = vmatmul.mubr.f32.gmra.mrb[0].mxu0 %v548
    %v615 = vpop.f32.mrb[0].mxu0
    %v616 = vadd.f32 0.0, %v615
    %v617 = vpop.f32.mrb[0].mxu0
    %618 = vmatprep.mubr.f32.mxu0 0.0
    %619 = vmatmul.mubr.f32.gmra.mrb[0].mxu0 %v384
    %v620 = vpop.f32.mrb[0].mxu0
    %v621 = vadd.f32 0.0, %v620
    %v622 = vpop.f32.mrb[0].mxu0
    %623 = vdwg.mxu0
    %v624 = vmul.f32 %v616, %v72
    %v625 = vadd.f32 %v286, %v624
    %v626 = vmul.f32 %v621, %v470
    %v627 = vadd.f32 %v625, %v626
    %v628 = vmul.f32 %v466, %v466
    %v629 = vsub.f32 1.0, %v628
    %v630 = vmul.f32 %v629, %v627
    %v631 = vsub.f32 %v470, %v630
    %v632 = vmul.f32 %v544, %v467
    %v633 = vmul.f32 %v386, %v631
    %v634 = vadd.f32 %v632, %v633
    %v635 = vadd.f32 %v634, %v630
    %636 = vst [vmem:[#allocation8] sm:$0xff] %v635
    // Predicated region
    $region46: #{_cont_gru_delay_impl.1} parent=1 // pred_check
      _
    $region47: #{_cont_gru_delay_impl.1} parent=1 // pred_check_branch
      %638 = sbr.rel (0) target = $region49
    $region48: #{_cont_gru_delay_impl.1} parent=1 // pred_region
      %s640 = ssub.s32 128, 128
      %641 = vsyncadd [#allocation4], %s640
      %s643 = sshll.u32 [#allocation8], 4
      %s644 = int_to_ptr.vmem [resolvable:$true] %s643
      %646 = dma.vmem_to_hbm [thread:$0]  %s644, 128, %s8, [#allocation4]
    $region49: #{_cont_gru_delay_impl.1} parent=1 // pred_fallthru
      _
    // Predicated region
    $region50: #{_cont_gru_delay_impl.1} parent=1 // pred_check
      _
    $region51: #{_cont_gru_delay_impl.1} parent=1 // pred_check_branch
      %648 = sbr.rel (0) target = $region53
    $region52: #{_cont_gru_delay_impl.1} parent=1 // pred_region
      %649 = dma.done [#allocation4], 128
    $region53: #{_cont_gru_delay_impl.1} parent=1 // pred_fallthru
      _
    %650 = vsyncpa [#allocation3], 1
    %651 = vsyncpa [#allocation6], 1
    %652 = vsyncpa [#allocation4], 1

// kernel: _cont_gru_delay_impl.1
$region0: #{_cont_gru_delay_impl.1}
  #allocation0 [shape = 'u32[]', space=smem, size = 0x4, offset = 0x4, fixed_abs, tag = 'smem constant byte address 0x4 - core index']
  #allocation1 [shape = 'u32[144,128]{1,0:T(1,128)}', space=vmem, size = 0x12000, scoped, tag = 'internal scratch']
  %s0 = inlined_call_operand.vmem [shape: f32[8,16], index: 0, kind: input, shape index: {}]
  %s1 = inlined_call_operand.vmem [shape: f32[8,128], index: 1, kind: input, shape index: {}]
  %s2 = inlined_call_operand.vmem [shape: f32[8,16], index: 2, kind: input, shape index: {}]
  %s3 = inlined_call_operand.hbm [shape: f32[16,384], index: 3, kind: input, shape index: {}]
  %s4 = inlined_call_operand.hbm [shape: f32[128,256], index: 4, kind: input, shape index: {}]
  %s5 = inlined_call_operand.hbm [shape: f32[128,128], index: 5, kind: input, shape index: {}]
  %s6 = inlined_call_operand.vmem [shape: f32[1,256], index: 6, kind: input, shape index: {}]
  %s7 = inlined_call_operand.vmem [shape: f32[1,128], index: 7, kind: input, shape index: {}]
  %s8 = inlined_call_operand.hbm [shape: f32[8,128], index: 8, kind: output, shape index: {}]
  %s9 = sld [smem:[#allocation0]]
  $region54: #{_cont_gru_delay_impl.1} parent=0
    _
  %s11 = ssub.s32 1, %s9
  %s12 = scalar_select 0, %s11, %s9
  $region1: #{_cont_gru_delay_impl.1} parent=0
    #allocation2 [shape = 'u8[24576]{0}', space=vmem, size = 0x6000, scoped, tag = 'input window, operand 3, single buffered']
    #allocation3 [shape = 's32[1]{0}', space=sflag, size = 0x4, scoped, tag = 'scoped memory for _cont_gru_delay_impl.1']
    #allocation4 [shape = 's32[1]{0}', space=sflag, size = 0x4, scoped, tag = 'scoped memory for _cont_gru_delay_impl.1']
    #allocation5 [shape = 'u8[131072]{0}', space=vmem, size = 0x20000, scoped, tag = 'input window, operand 4, single buffered']
    #allocation6 [shape = 's32[1]{0}', space=sflag, size = 0x4, scoped, tag = 'scoped memory for _cont_gru_delay_impl.1']
    #allocation7 [shape = 'u8[65536]{0}', space=vmem, size = 0x10000, scoped, tag = 'input window, operand 5, single buffered']
    #allocation8 [shape = 'u8[4096]{0}', space=vmem, size = 0x1000, scoped, tag = 'output window, operand 0, single buffered']
    %13 = vsyncpa [#allocation3], 0
    %14 = vsyncpa [#allocation6], 0
    %15 = vsyncpa [#allocation4], 0
    // Predicated region
    $region2: #{_cont_gru_delay_impl.1} parent=1 // pred_check
      _
    $region3: #{_cont_gru_delay_impl.1} parent=1 // pred_check_branch
      %17 = sbr.rel (0) target = $region5
    $region4: #{_cont_gru_delay_impl.1} parent=1 // pred_region
      _
    $region5: #{_cont_gru_delay_impl.1} parent=1 // pred_fallthru
      _
    // Predicated region
    $region6: #{_cont_gru_delay_impl.1} parent=1 // pred_check
      _
    $region7: #{_cont_gru_delay_impl.1} parent=1 // pred_check_branch
      %19 = sbr.rel (0) target = $region9
    $region8: #{_cont_gru_delay_impl.1} parent=1 // pred_region
      _
    $region9: #{_cont_gru_delay_impl.1} parent=1 // pred_fallthru
      _
    // Predicated region
    $region10: #{_cont_gru_delay_impl.1} parent=1 // pred_check
      _
    $region11: #{_cont_gru_delay_impl.1} parent=1 // pred_check_branch
      %21 = sbr.rel (0) target = $region13
    $region12: #{_cont_gru_delay_impl.1} parent=1 // pred_region
      _
    $region13: #{_cont_gru_delay_impl.1} parent=1 // pred_fallthru
      _
    // Predicated region
    $region14: #{_cont_gru_delay_impl.1} parent=1 // pred_check
      _
    $region15: #{_cont_gru_delay_impl.1} parent=1 // pred_check_branch
      %23 = sbr.rel (0) target = $region17
    $region16: #{_cont_gru_delay_impl.1} parent=1 // pred_region
      %s25 = ssub.s32 768, 768
      %26 = vsyncadd [#allocation3], %s25
      %s27 = sshll.u32 [#allocation2], 4
      %s28 = int_to_ptr.vmem [resolvable:$true] %s27
      %33 = dma.hbm_to_vmem [thread:$0]  %s3, 768, %s28, [#allocation3], 384, 384, 24
    $region17: #{_cont_gru_delay_impl.1} parent=1 // pred_fallthru
      _
    // Predicated region
    $region18: #{_cont_gru_delay_impl.1} parent=1 // pred_check
      _
    $region19: #{_cont_gru_delay_impl.1} parent=1 // pred_check_branch
      %35 = sbr.rel (0) target = $region21
    $region20: #{_cont_gru_delay_impl.1} parent=1 // pred_region
      %s37 = ssub.s32 4096, 4096
      %38 = vsyncadd [#allocation6], %s37
      %s39 = sshll.u32 [#allocation5], 4
      %s40 = int_to_ptr.vmem [resolvable:$true] %s39
      %45 = dma.hbm_to_vmem [thread:$0]  %s4, 4096, %s40, [#allocation6], 256, 256, 16
    $region21: #{_cont_gru_delay_impl.1} parent=1 // pred_fallthru
      _
    // Predicated region
    $region22: #{_cont_gru_delay_impl.1} parent=1 // pred_check
      _
    $region23: #{_cont_gru_delay_impl.1} parent=1 // pred_check_branch
      %47 = sbr.rel (0) target = $region25
    $region24: #{_cont_gru_delay_impl.1} parent=1 // pred_region
      %s49 = ssub.s32 2048, 2048
      %50 = vsyncadd [#allocation6], %s49
      %s51 = sshll.u32 [#allocation7], 4
      %s52 = int_to_ptr.vmem [resolvable:$true] %s51
      %57 = dma.hbm_to_vmem [thread:$0]  %s5, 2048, %s52, [#allocation6], 128, 128, 8
    $region25: #{_cont_gru_delay_impl.1} parent=1 // pred_fallthru
      _
    // Predicated region
    $region26: #{_cont_gru_delay_impl.1} parent=1 // pred_check
      _
    $region27: #{_cont_gru_delay_impl.1} parent=1 // pred_check_branch
      %59 = sbr.rel (0) target = $region29
    $region28: #{_cont_gru_delay_impl.1} parent=1 // pred_region
      _
    $region29: #{_cont_gru_delay_impl.1} parent=1 // pred_fallthru
      _
    // Predicated region
    $region30: #{_cont_gru_delay_impl.1} parent=1 // pred_check
      _
    $region31: #{_cont_gru_delay_impl.1} parent=1 // pred_check_branch
      %61 = sbr.rel (0) target = $region33
    $region32: #{_cont_gru_delay_impl.1} parent=1 // pred_region
      _
    $region33: #{_cont_gru_delay_impl.1} parent=1 // pred_fallthru
      _
    // Predicated region
    $region34: #{_cont_gru_delay_impl.1} parent=1 // pred_check
      _
    $region35: #{_cont_gru_delay_impl.1} parent=1 // pred_check_branch
      %63 = sbr.rel (0) target = $region37
    $region36: #{_cont_gru_delay_impl.1} parent=1 // pred_region
      %64 = dma.done [#allocation3], 768
    $region37: #{_cont_gru_delay_impl.1} parent=1 // pred_fallthru
      _
    // Predicated region
    $region38: #{_cont_gru_delay_impl.1} parent=1 // pred_check
      _
    $region39: #{_cont_gru_delay_impl.1} parent=1 // pred_check_branch
      %66 = sbr.rel (0) target = $region41
    $region40: #{_cont_gru_delay_impl.1} parent=1 // pred_region
      %67 = dma.done [#allocation6], 4096
    $region41: #{_cont_gru_delay_impl.1} parent=1 // pred_fallthru
      _
    // Predicated region
    $region42: #{_cont_gru_delay_impl.1} parent=1 // pred_check
      _
    $region43: #{_cont_gru_delay_impl.1} parent=1 // pred_check_branch
      %69 = sbr.rel (0) target = $region45
    $region44: #{_cont_gru_delay_impl.1} parent=1 // pred_region
      %70 = dma.done [#allocation6], 2048
    $region45: #{_cont_gru_delay_impl.1} parent=1 // pred_fallthru
      _
    %v71 = vld [vmem:[%s0] sm:$0xff]
    %v72 = vld [vmem:[%s1] sm:$0xff]
    %v73 = vld [vmem:[%s2] sm:$0xff]
    %v74 = vld [vmem:[#allocation2] sm:$0xff]
    %v75 = vld [vmem:[#allocation2 + $0x8] sm:$0xff]
    %v76 = vld [vmem:[#allocation2 + $0x10] sm:$0xff]
    %v77 = vld [vmem:[#allocation2 + $0x18] sm:$0xff]
    %v78 = vld [vmem:[#allocation2 + $0x20] sm:$0xff]
    %v79 = vld [vmem:[#allocation2 + $0x28] sm:$0xff]
    %v80 = vld [vmem:[#allocation5] sm:$0xff]
    %v81 = vld [vmem:[#allocation5 + $0x8] sm:$0xff]
    %v82 = vld [vmem:[#allocation5 + $0x10] sm:$0xff]
    %v83 = vld [vmem:[#allocation5 + $0x18] sm:$0xff]
    %v84 = vld [vmem:[#allocation5 + $0x20] sm:$0xff]
    %v85 = vld [vmem:[#allocation5 + $0x28] sm:$0xff]
    %v86 = vld [vmem:[#allocation5 + $0x30] sm:$0xff]
    %v87 = vld [vmem:[#allocation5 + $0x38] sm:$0xff]
    %v88 = vld [vmem:[#allocation5 + $0x40] sm:$0xff]
    %v89 = vld [vmem:[#allocation5 + $0x48] sm:$0xff]
    %v90 = vld [vmem:[#allocation5 + $0x50] sm:$0xff]
    %v91 = vld [vmem:[#allocation5 + $0x58] sm:$0xff]
    %v92 = vld [vmem:[#allocation5 + $0x60] sm:$0xff]
    %v93 = vld [vmem:[#allocation5 + $0x68] sm:$0xff]
    %v94 = vld [vmem:[#allocation5 + $0x70] sm:$0xff]
    %v95 = vld [vmem:[#allocation5 + $0x78] sm:$0xff]
    %v96 = vld [vmem:[#allocation5 + $0x80] sm:$0xff]
    %v97 = vld [vmem:[#allocation5 + $0x88] sm:$0xff]
    %v98 = vld [vmem:[#allocation5 + $0x90] sm:$0xff]
    %v99 = vld [vmem:[#allocation5 + $0x98] sm:$0xff]
    %v100 = vld [vmem:[#allocation5 + $0xa0] sm:$0xff]
    %v101 = vld [vmem:[#allocation5 + $0xa8] sm:$0xff]
    %v102 = vld [vmem:[#allocation5 + $0xb0] sm:$0xff]
    %v103 = vld [vmem:[#allocation5 + $0xb8] sm:$0xff]
    %v104 = vld [vmem:[#allocation5 + $0xc0] sm:$0xff]
    %v105 = vld [vmem:[#allocation5 + $0xc8] sm:$0xff]
    %v106 = vld [vmem:[#allocation5 + $0xd0] sm:$0xff]
    %v107 = vld [vmem:[#allocation5 + $0xd8] sm:$0xff]
    %v108 = vld [vmem:[#allocation5 + $0xe0] sm:$0xff]
    %v109 = vld [vmem:[#allocation5 + $0xe8] sm:$0xff]
    %v110 = vld [vmem:[#allocation5 + $0xf0] sm:$0xff]
    %v111 = vld [vmem:[#allocation5 + $0xf8] sm:$0xff]
    %v112 = vld [vmem:[#allocation7] sm:$0xff]
    %v113 = vld [vmem:[#allocation7 + $0x8] sm:$0xff]
    %v114 = vld [vmem:[#allocation7 + $0x10] sm:$0xff]
    %v115 = vld [vmem:[#allocation7 + $0x18] sm:$0xff]
    %v116 = vld [vmem:[#allocation7 + $0x20] sm:$0xff]
    %v117 = vld [vmem:[#allocation7 + $0x28] sm:$0xff]
    %v118 = vld [vmem:[#allocation7 + $0x30] sm:$0xff]
    %v119 = vld [vmem:[#allocation7 + $0x38] sm:$0xff]
    %v120 = vld [vmem:[#allocation7 + $0x40] sm:$0xff]
    %v121 = vld [vmem:[#allocation7 + $0x48] sm:$0xff]
    %v122 = vld [vmem:[#allocation7 + $0x50] sm:$0xff]
    %v123 = vld [vmem:[#allocation7 + $0x58] sm:$0xff]
    %v124 = vld [vmem:[#allocation7 + $0x60] sm:$0xff]
    %v125 = vld [vmem:[#allocation7 + $0x68] sm:$0xff]
    %v126 = vld [vmem:[#allocation7 + $0x70] sm:$0xff]
    %v127 = vld [vmem:[#allocation7 + $0x78] sm:$0xff]
    %v128 = vld [vmem:[%s6] sm:$0x3]
    %v129 = vld [vmem:[%s7] sm:$0x1]
    %vm130 = vcmask 130048
    %v132 = vsel %vm130, %v71, 0
    %v135 = vsel %vm130, %v73, 0
    %137 = vmatprep.subr.mxu0 %v75
    %138 = vmatpush1.msra.mxu0 %v74
    %139 = vmatprep.subr.mxu0 %v78
    %140 = vmatpush1.msra.mxu0 %v77
    %141 = vmatprep.subr.mxu0 0.0
    %142 = vmatpush1.msra.mxu0 0.0
    %143 = vmatprep.subr.mxu0 0.0
    %144 = vmatpush1.msra.mxu0 0.0
    %145 = vmatprep.subr.mxu0 0.0
    %146 = vmatpush1.msra.mxu0 0.0
    %147 = vmatprep.subr.mxu0 0.0
    %148 = vmatpush1.msra.mxu0 0.0
    %149 = vmatprep.subr.mxu0 0.0
    %150 = vmatpush1.msra.mxu0 0.0
    %151 = vmatprep.subr.mxu0 0.0
    %152 = vmatpush1.msra.mxu0 0.0
    %153 = vmatprep.subr.mxu0 0.0
    %154 = vmatpush1.msra.mxu0 0.0
    %155 = vmatprep.subr.mxu0 0.0
    %156 = vmatpush1.msra.mxu0 0.0
    %157 = vmatprep.subr.mxu0 0.0
    %158 = vmatpush1.msra.mxu0 0.0
    %159 = vmatprep.subr.mxu0 0.0
    %160 = vmatpush1.msra.mxu0 0.0
    %161 = vmatprep.subr.mxu0 0.0
    %162 = vmatpush1.msra.mxu0 0.0
    %163 = vmatprep.subr.mxu0 0.0
    %164 = vmatpush1.msra.mxu0 0.0
    %165 = vmatprep.subr.mxu0 0.0
    %166 = vmatpush1.msra.mxu0 0.0
    %167 = vmatprep.subr.mxu0 0.0
    %168 = vmatpush1.msra.mxu0 0.0
    %169 = vmatprep.subr.mxu0 0.0
    %170 = vmatpush1.msra.mxu0 0.0
    %171 = vmatprep.subr.mxu0 0.0
    %172 = vmatpush1.msra.mxu0 0.0
    %173 = vmatprep.subr.mxu0 0.0
    %174 = vmatpush1.msra.mxu0 0.0
    %175 = vmatprep.subr.mxu0 0.0
    %176 = vmatpush1.msra.mxu0 0.0
    %177 = vmatprep.subr.mxu0 0.0
    %178 = vmatpush1.msra.mxu0 0.0
    %179 = vmatprep.subr.mxu0 0.0
    %180 = vmatpush1.msra.mxu0 0.0
    %181 = vmatprep.subr.mxu0 0.0
    %182 = vmatpush1.msra.mxu0 0.0
    %183 = vmatprep.subr.mxu0 0.0
    %184 = vmatpush1.msra.mxu0 0.0
    %185 = vmatprep.subr.mxu0 0.0
    %186 = vmatpush1.msra.mxu0 0.0
    %187 = vmatprep.subr.mxu0 0.0
    %188 = vmatpush1.msra.mxu0 0.0
    %189 = vmatprep.subr.mxu0 0.0
    %190 = vmatpush1.msra.mxu0 0.0
    %191 = vmatprep.subr.mxu0 0.0
    %192 = vmatpush1.msra.mxu0 0.0
    %193 = vmatprep.subr.mxu0 0.0
    %194 = vmatpush1.msra.mxu0 0.0
    %195 = vmatprep.subr.mxu0 0.0
    %196 = vmatpush1.msra.mxu0 0.0
    %197 = vmatprep.subr.mxu0 0.0
    %198 = vmatpush1.msra.mxu0 0.0
    %199 = vmatprep.subr.mxu0 0.0
    %200 = vmatpush1.msra.mxu0 0.0
    %201 = vmatprep.mubr.f32.mxu0 0.0
    %202 = vmatmul.mubr.f32.gmra.mrb[0].mxu0 %v132
    %v203 = vpop.f32.mrb[0].mxu0
    %v204 = vadd.f32 0.0, %v203
    %v205 = vpop.f32.mrb[0].mxu0
    %v206 = vadd.f32 0.0, %v205
    %207 = vmatprep.mubr.f32.mxu0 0.0
    %208 = vmatmul.mubr.f32.gmra.mrb[0].mxu0 %v135
    %v209 = vpop.f32.mrb[0].mxu0
    %v210 = vadd.f32 0.0, %v209
    %v211 = vpop.f32.mrb[0].mxu0
    %v212 = vadd.f32 0.0, %v211
    %213 = vdwg.mxu0
    %214 = vmatprep.subr.mxu0 0.0
    %215 = vmatpush1.msra.mxu0 %v76
    %216 = vmatprep.subr.mxu0 0.0
    %217 = vmatpush1.msra.mxu0 %v79
    %218 = vmatprep.subr.mxu0 0.0
    %219 = vmatpush1.msra.mxu0 0.0
    %220 = vmatprep.subr.mxu0 0.0
    %221 = vmatpush1.msra.mxu0 0.0
    %222 = vmatprep.subr.mxu0 0.0
    %223 = vmatpush1.msra.mxu0 0.0
    %224 = vmatprep.subr.mxu0 0.0
    %225 = vmatpush1.msra.mxu0 0.0
    %226 = vmatprep.subr.mxu0 0.0
    %227 = vmatpush1.msra.mxu0 0.0
    %228 = vmatprep.subr.mxu0 0.0
    %229 = vmatpush1.msra.mxu0 0.0
    %230 = vmatprep.subr.mxu0 0.0
    %231 = vmatpush1.msra.mxu0 0.0
    %232 = vmatprep.subr.mxu0 0.0
    %233 = vmatpush1.msra.mxu0 0.0
    %234 = vmatprep.subr.mxu0 0.0
    %235 = vmatpush1.msra.mxu0 0.0
    %236 = vmatprep.subr.mxu0 0.0
    %237 = vmatpush1.msra.mxu0 0.0
    %238 = vmatprep.subr.mxu0 0.0
    %239 = vmatpush1.msra.mxu0 0.0
    %240 = vmatprep.subr.mxu0 0.0
    %241 = vmatpush1.msra.mxu0 0.0
    %242 = vmatprep.subr.mxu0 0.0
    %243 = vmatpush1.msra.mxu0 0.0
    %244 = vmatprep.subr.mxu0 0.0
    %245 = vmatpush1.msra.mxu0 0.0
    %246 = vmatprep.subr.mxu0 0.0
    %247 = vmatpush1.msra.mxu0 0.0
    %248 = vmatprep.subr.mxu0 0.0
    %249 = vmatpush1.msra.mxu0 0.0
    %250 = vmatprep.subr.mxu0 0.0
    %251 = vmatpush1.msra.mxu0 0.0
    %252 = vmatprep.subr.mxu0 0.0
    %253 = vmatpush1.msra.mxu0 0.0
    %254 = vmatprep.subr.mxu0 0.0
    %255 = vmatpush1.msra.mxu0 0.0
    %256 = vmatprep.subr.mxu0 0.0
    %257 = vmatpush1.msra.mxu0 0.0
    %258 = vmatprep.subr.mxu0 0.0
    %259 = vmatpush1.msra.mxu0 0.0
    %260 = vmatprep.subr.mxu0 0.0
    %261 = vmatpush1.msra.mxu0 0.0
    %262 = vmatprep.subr.mxu0 0.0
    %263 = vmatpush1.msra.mxu0 0.0
    %264 = vmatprep.subr.mxu0 0.0
    %265 = vmatpush1.msra.mxu0 0.0
    %266 = vmatprep.subr.mxu0 0.0
    %267 = vmatpush1.msra.mxu0 0.0
    %268 = vmatprep.subr.mxu0 0.0
    %269 = vmatpush1.msra.mxu0 0.0
    %270 = vmatprep.subr.mxu0 0.0
    %271 = vmatpush1.msra.mxu0 0.0
    %272 = vmatprep.subr.mxu0 0.0
    %273 = vmatpush1.msra.mxu0 0.0
    %274 = vmatprep.subr.mxu0 0.0
    %275 = vmatpush1.msra.mxu0 0.0
    %276 = vmatprep.subr.mxu0 0.0
    %277 = vmatpush1.msra.mxu0 0.0
    %278 = vmatprep.mubr.f32.mxu0 0.0
    %279 = vmatmul.mubr.f32.gmra.mrb[0].mxu0 %v132
    %v280 = vpop.f32.mrb[0].mxu0
    %v281 = vadd.f32 0.0, %v280
    %v282 = vpop.f32.mrb[0].mxu0
    %283 = vmatprep.mubr.f32.mxu0 0.0
    %284 = vmatmul.mubr.f32.gmra.mrb[0].mxu0 %v135
    %v285 = vpop.f32.mrb[0].mxu0
    %v286 = vadd.f32 0.0, %v285
    %v287 = vpop.f32.mrb[0].mxu0
    %288 = vdwg.mxu0
    %289 = vmatprep.subr.mxu0 %v81
    %290 = vmatpush1.msra.mxu0 %v80
    %291 = vmatprep.subr.mxu0 %v83
    %292 = vmatpush1.msra.mxu0 %v82
    %293 = vmatprep.subr.mxu0 %v85
    %294 = vmatpush1.msra.mxu0 %v84
    %295 = vmatprep.subr.mxu0 %v87
    %296 = vmatpush1.msra.mxu0 %v86
    %297 = vmatprep.subr.mxu0 %v89
    %298 = vmatpush1.msra.mxu0 %v88
    %299 = vmatprep.subr.mxu0 %v91
    %300 = vmatpush1.msra.mxu0 %v90
    %301 = vmatprep.subr.mxu0 %v93
    %302 = vmatpush1.msra.mxu0 %v92
    %303 = vmatprep.subr.mxu0 %v95
    %304 = vmatpush1.msra.mxu0 %v94
    %305 = vmatprep.subr.mxu0 %v97
    %306 = vmatpush1.msra.mxu0 %v96
    %307 = vmatprep.subr.mxu0 %v99
    %308 = vmatpush1.msra.mxu0 %v98
    %309 = vmatprep.subr.mxu0 %v101
    %310 = vmatpush1.msra.mxu0 %v100
    %311 = vmatprep.subr.mxu0 %v103
    %312 = vmatpush1.msra.mxu0 %v102
    %313 = vmatprep.subr.mxu0 %v105
    %314 = vmatpush1.msra.mxu0 %v104
    %315 = vmatprep.subr.mxu0 %v107
    %316 = vmatpush1.msra.mxu0 %v106
    %317 = vmatprep.subr.mxu0 %v109
    %318 = vmatpush1.msra.mxu0 %v108
    %319 = vmatprep.subr.mxu0 %v111
    %320 = vmatpush1.msra.mxu0 %v110
    %321 = vmatprep.subr.mxu0 0.0
    %322 = vmatpush1.msra.mxu0 0.0
    %323 = vmatprep.subr.mxu0 0.0
    %324 = vmatpush1.msra.mxu0 0.0
    %325 = vmatprep.subr.mxu0 0.0
    %326 = vmatpush1.msra.mxu0 0.0
    %327 = vmatprep.subr.mxu0 0.0
    %328 = vmatpush1.msra.mxu0 0.0
    %329 = vmatprep.subr.mxu0 0.0
    %330 = vmatpush1.msra.mxu0 0.0
    %331 = vmatprep.subr.mxu0 0.0
    %332 = vmatpush1.msra.mxu0 0.0
    %333 = vmatprep.subr.mxu0 0.0
    %334 = vmatpush1.msra.mxu0 0.0
    %335 = vmatprep.subr.mxu0 0.0
    %336 = vmatpush1.msra.mxu0 0.0
    %337 = vmatprep.subr.mxu0 0.0
    %338 = vmatpush1.msra.mxu0 0.0
    %339 = vmatprep.subr.mxu0 0.0
    %340 = vmatpush1.msra.mxu0 0.0
    %341 = vmatprep.subr.mxu0 0.0
    %342 = vmatpush1.msra.mxu0 0.0
    %343 = vmatprep.subr.mxu0 0.0
    %344 = vmatpush1.msra.mxu0 0.0
    %345 = vmatprep.subr.mxu0 0.0
    %346 = vmatpush1.msra.mxu0 0.0
    %347 = vmatprep.subr.mxu0 0.0
    %348 = vmatpush1.msra.mxu0 0.0
    %349 = vmatprep.subr.mxu0 0.0
    %350 = vmatpush1.msra.mxu0 0.0
    %351 = vmatprep.subr.mxu0 0.0
    %352 = vmatpush1.msra.mxu0 0.0
    %353 = vmatprep.mubr.f32.mxu0 0.0
    %354 = vmatmul.mubr.f32.gmra.mrb[0].mxu0 %v72
    %v355 = vpop.f32.mrb[0].mxu0
    %v356 = vadd.f32 0.0, %v355
    %v357 = vpop.f32.mrb[0].mxu0
    %v358 = vadd.f32 0.0, %v357
    %359 = vdwg.mxu0
    %v360 = vadd.f32 %v204, %v356
    %v361 = vadd.f32 %v206, %v358
    %v363 = vlaneseq
    %v364 = vshrl.u32 %v363, 7
    %v365 = vsub.s32 0, %v364
    %v366 = vrot.slane %v128, %v365
    %v367 = vlaneseq
    %v368 = vshrl.u32 %v367, 7
    %v369 = vsub.s32 1, %v368
    %v370 = vrot.slane %v128, %v369
    %v373 = vadd.f32 %v360, %v366
    %v374 = vadd.f32 %v361, %v370
    %v375 = vxor.u32 %v373, 2147483648
    %v376 = vxor.u32 %v374, 2147483648
    %v377 = vmul.f32 %v375, 1.442695
    %v378 = vpow.pop %v377
    %v379 = vmul.f32 %v376, 1.442695
    %v380 = vpow.pop %v379
    %v381 = vadd.f32 %v378, 1.0
    %v382 = vadd.f32 %v380, 1.0
    %v383 = vrcp.pop %v381
    %v384 = vmul.f32 1.0, %v383
    %v385 = vrcp.pop %v382
    %v386 = vmul.f32 1.0, %v385
    %v387 = vmul.f32 %v384, %v72
    %388 = vmatprep.subr.mxu0 0.0
    %389 = vmatpush1.msra.mxu0 %v112
    %390 = vmatprep.subr.mxu0 0.0
    %391 = vmatpush1.msra.mxu0 %v113
    %392 = vmatprep.subr.mxu0 0.0
    %393 = vmatpush1.msra.mxu0 %v114
    %394 = vmatprep.subr.mxu0 0.0
    %395 = vmatpush1.msra.mxu0 %v115
    %396 = vmatprep.subr.mxu0 0.0
    %397 = vmatpush1.msra.mxu0 %v116
    %398 = vmatprep.subr.mxu0 0.0
    %399 = vmatpush1.msra.mxu0 %v117
    %400 = vmatprep.subr.mxu0 0.0
    %401 = vmatpush1.msra.mxu0 %v118
    %402 = vmatprep.subr.mxu0 0.0
    %403 = vmatpush1.msra.mxu0 %v119
    %404 = vmatprep.subr.mxu0 0.0
    %405 = vmatpush1.msra.mxu0 %v120
    %406 = vmatprep.subr.mxu0 0.0
    %407 = vmatpush1.msra.mxu0 %v121
    %408 = vmatprep.subr.mxu0 0.0
    %409 = vmatpush1.msra.mxu0 %v122
    %410 = vmatprep.subr.mxu0 0.0
    %411 = vmatpush1.msra.mxu0 %v123
    %412 = vmatprep.subr.mxu0 0.0
    %413 = vmatpush1.msra.mxu0 %v124
    %414 = vmatprep.subr.mxu0 0.0
    %415 = vmatpush1.msra.mxu0 %v125
    %416 = vmatprep.subr.mxu0 0.0
    %417 = vmatpush1.msra.mxu0 %v126
    %418 = vmatprep.subr.mxu0 0.0
    %419 = vmatpush1.msra.mxu0 %v127
    %420 = vmatprep.subr.mxu0 0.0
    %421 = vmatpush1.msra.mxu0 0.0
    %422 = vmatprep.subr.mxu0 0.0
    %423 = vmatpush1.msra.mxu0 0.0
    %424 = vmatprep.subr.mxu0 0.0
    %425 = vmatpush1.msra.mxu0 0.0
    %426 = vmatprep.subr.mxu0 0.0
    %427 = vmatpush1.msra.mxu0 0.0
    %428 = vmatprep.subr.mxu0 0.0
    %429 = vmatpush1.msra.mxu0 0.0
    %430 = vmatprep.subr.mxu0 0.0
    %431 = vmatpush1.msra.mxu0 0.0
    %432 = vmatprep.subr.mxu0 0.0
    %433 = vmatpush1.msra.mxu0 0.0
    %434 = vmatprep.subr.mxu0 0.0
    %435 = vmatpush1.msra.mxu0 0.0
    %436 = vmatprep.subr.mxu0 0.0
    %437 = vmatpush1.msra.mxu0 0.0
    %438 = vmatprep.subr.mxu0 0.0
    %439 = vmatpush1.msra.mxu0 0.0
    %440 = vmatprep.subr.mxu0 0.0
    %441 = vmatpush1.msra.mxu0 0.0
    %442 = vmatprep.subr.mxu0 0.0
    %443 = vmatpush1.msra.mxu0 0.0
    %444 = vmatprep.subr.mxu0 0.0
    %445 = vmatpush1.msra.mxu0 0.0
    %446 = vmatprep.subr.mxu0 0.0
    %447 = vmatpush1.msra.mxu0 0.0
    %448 = vmatprep.subr.mxu0 0.0
    %449 = vmatpush1.msra.mxu0 0.0
    %450 = vmatprep.subr.mxu0 0.0
    %451 = vmatpush1.msra.mxu0 0.0
    %452 = vmatprep.mubr.f32.mxu0 0.0
    %453 = vmatmul.mubr.f32.gmra.mrb[0].mxu0 %v387
    %v454 = vpop.f32.mrb[0].mxu0
    %v455 = vadd.f32 0.0, %v454
    %v456 = vpop.f32.mrb[0].mxu0
    %457 = vdwg.mxu0
    %v458 = vadd.f32 %v281, %v455
    %v460 = vlaneseq
    %v461 = vshrl.u32 %v460, 7
    %v462 = vsub.s32 0, %v461
    %v463 = vrot.slane %v129, %v462
    %v465 = vadd.f32 %v458, %v463
    %v466 = vtanh.pop %v465
    %v467 = vsub.f32 %v72, %v466
    %v468 = vsub.f32 1.0, %v386
    %v469 = vsub.f32 %v466, %v72
    %v470 = vmul.f32 %v468, %v469
    %471 = vmatprep.subr.mxu0 %v81
    %472 = vmatpush1.msra.mxu0 %v80
    %473 = vmatprep.subr.mxu0 %v83
    %474 = vmatpush1.msra.mxu0 %v82
    %475 = vmatprep.subr.mxu0 %v85
    %476 = vmatpush1.msra.mxu0 %v84
    %477 = vmatprep.subr.mxu0 %v87
    %478 = vmatpush1.msra.mxu0 %v86
    %479 = vmatprep.subr.mxu0 %v89
    %480 = vmatpush1.msra.mxu0 %v88
    %481 = vmatprep.subr.mxu0 %v91
    %482 = vmatpush1.msra.mxu0 %v90
    %483 = vmatprep.subr.mxu0 %v93
    %484 = vmatpush1.msra.mxu0 %v92
    %485 = vmatprep.subr.mxu0 %v95
    %486 = vmatpush1.msra.mxu0 %v94
    %487 = vmatprep.subr.mxu0 %v97
    %488 = vmatpush1.msra.mxu0 %v96
    %489 = vmatprep.subr.mxu0 %v99
    %490 = vmatpush1.msra.mxu0 %v98
    %491 = vmatprep.subr.mxu0 %v101
    %492 = vmatpush1.msra.mxu0 %v100
    %493 = vmatprep.subr.mxu0 %v103
    %494 = vmatpush1.msra.mxu0 %v102
    %495 = vmatprep.subr.mxu0 %v105
    %496 = vmatpush1.msra.mxu0 %v104
    %497 = vmatprep.subr.mxu0 %v107
    %498 = vmatpush1.msra.mxu0 %v106
    %499 = vmatprep.subr.mxu0 %v109
    %500 = vmatpush1.msra.mxu0 %v108
    %501 = vmatprep.subr.mxu0 %v111
    %502 = vmatpush1.msra.mxu0 %v110
    %503 = vmatprep.subr.mxu0 0.0
    %504 = vmatpush1.msra.mxu0 0.0
    %505 = vmatprep.subr.mxu0 0.0
    %506 = vmatpush1.msra.mxu0 0.0
    %507 = vmatprep.subr.mxu0 0.0
    %508 = vmatpush1.msra.mxu0 0.0
    %509 = vmatprep.subr.mxu0 0.0
    %510 = vmatpush1.msra.mxu0 0.0
    %511 = vmatprep.subr.mxu0 0.0
    %512 = vmatpush1.msra.mxu0 0.0
    %513 = vmatprep.subr.mxu0 0.0
    %514 = vmatpush1.msra.mxu0 0.0
    %515 = vmatprep.subr.mxu0 0.0
    %516 = vmatpush1.msra.mxu0 0.0
    %517 = vmatprep.subr.mxu0 0.0
    %518 = vmatpush1.msra.mxu0 0.0
    %519 = vmatprep.subr.mxu0 0.0
    %520 = vmatpush1.msra.mxu0 0.0
    %521 = vmatprep.subr.mxu0 0.0
    %522 = vmatpush1.msra.mxu0 0.0
    %523 = vmatprep.subr.mxu0 0.0
    %524 = vmatpush1.msra.mxu0 0.0
    %525 = vmatprep.subr.mxu0 0.0
    %526 = vmatpush1.msra.mxu0 0.0
    %527 = vmatprep.subr.mxu0 0.0
    %528 = vmatpush1.msra.mxu0 0.0
    %529 = vmatprep.subr.mxu0 0.0
    %530 = vmatpush1.msra.mxu0 0.0
    %531 = vmatprep.subr.mxu0 0.0
    %532 = vmatpush1.msra.mxu0 0.0
    %533 = vmatprep.subr.mxu0 0.0
    %534 = vmatpush1.msra.mxu0 0.0
    %535 = vmatprep.mubr.f32.mxu0 0.0
    %536 = vmatmul.mubr.f32.gmra.mrb[0].mxu0 %v470
    %v537 = vpop.f32.mrb[0].mxu0
    %v538 = vadd.f32 0.0, %v537
    %v539 = vpop.f32.mrb[0].mxu0
    %v540 = vadd.f32 0.0, %v539
    %541 = vdwg.mxu0
    %v542 = vadd.f32 %v212, %v540
    %v543 = vmul.f32 %v386, %v468
    %v544 = vmul.f32 %v543, %v542
    %v545 = vsub.f32 1.0, %v384
    %v546 = vmul.f32 %v384, %v545
    %v547 = vadd.f32 %v210, %v538
    %v548 = vmul.f32 %v546, %v547
    %549 = vmatprep.subr.mxu0 0.0
    %550 = vmatpush1.msra.mxu0 %v112
    %551 = vmatprep.subr.mxu0 0.0
    %552 = vmatpush1.msra.mxu0 %v113
    %553 = vmatprep.subr.mxu0 0.0
    %554 = vmatpush1.msra.mxu0 %v114
    %555 = vmatprep.subr.mxu0 0.0
    %556 = vmatpush1.msra.mxu0 %v115
    %557 = vmatprep.subr.mxu0 0.0
    %558 = vmatpush1.msra.mxu0 %v116
    %559 = vmatprep.subr.mxu0 0.0
    %560 = vmatpush1.msra.mxu0 %v117
    %561 = vmatprep.subr.mxu0 0.0
    %562 = vmatpush1.msra.mxu0 %v118
    %563 = vmatprep.subr.mxu0 0.0
    %564 = vmatpush1.msra.mxu0 %v119
    %565 = vmatprep.subr.mxu0 0.0
    %566 = vmatpush1.msra.mxu0 %v120
    %567 = vmatprep.subr.mxu0 0.0
    %568 = vmatpush1.msra.mxu0 %v121
    %569 = vmatprep.subr.mxu0 0.0
    %570 = vmatpush1.msra.mxu0 %v122
    %571 = vmatprep.subr.mxu0 0.0
    %572 = vmatpush1.msra.mxu0 %v123
    %573 = vmatprep.subr.mxu0 0.0
    %574 = vmatpush1.msra.mxu0 %v124
    %575 = vmatprep.subr.mxu0 0.0
    %576 = vmatpush1.msra.mxu0 %v125
    %577 = vmatprep.subr.mxu0 0.0
    %578 = vmatpush1.msra.mxu0 %v126
    %579 = vmatprep.subr.mxu0 0.0
    %580 = vmatpush1.msra.mxu0 %v127
    %581 = vmatprep.subr.mxu0 0.0
    %582 = vmatpush1.msra.mxu0 0.0
    %583 = vmatprep.subr.mxu0 0.0
    %584 = vmatpush1.msra.mxu0 0.0
    %585 = vmatprep.subr.mxu0 0.0
    %586 = vmatpush1.msra.mxu0 0.0
    %587 = vmatprep.subr.mxu0 0.0
    %588 = vmatpush1.msra.mxu0 0.0
    %589 = vmatprep.subr.mxu0 0.0
    %590 = vmatpush1.msra.mxu0 0.0
    %591 = vmatprep.subr.mxu0 0.0
    %592 = vmatpush1.msra.mxu0 0.0
    %593 = vmatprep.subr.mxu0 0.0
    %594 = vmatpush1.msra.mxu0 0.0
    %595 = vmatprep.subr.mxu0 0.0
    %596 = vmatpush1.msra.mxu0 0.0
    %597 = vmatprep.subr.mxu0 0.0
    %598 = vmatpush1.msra.mxu0 0.0
    %599 = vmatprep.subr.mxu0 0.0
    %600 = vmatpush1.msra.mxu0 0.0
    %601 = vmatprep.subr.mxu0 0.0
    %602 = vmatpush1.msra.mxu0 0.0
    %603 = vmatprep.subr.mxu0 0.0
    %604 = vmatpush1.msra.mxu0 0.0
    %605 = vmatprep.subr.mxu0 0.0
    %606 = vmatpush1.msra.mxu0 0.0
    %607 = vmatprep.subr.mxu0 0.0
    %608 = vmatpush1.msra.mxu0 0.0
    %609 = vmatprep.subr.mxu0 0.0
    %610 = vmatpush1.msra.mxu0 0.0
    %611 = vmatprep.subr.mxu0 0.0
    %612 = vmatpush1.msra.mxu0 0.0
    %613 = vmatprep.mubr.f32.mxu0 0.0
    %614 = vmatmul.mubr.f32.gmra.mrb[0].mxu0 %v548
    %v615 = vpop.f32.mrb[0].mxu0
    %v616 = vadd.f32 0.0, %v615
    %v617 = vpop.f32.mrb[0].mxu0
    %618 = vmatprep.mubr.f32.mxu0 0.0
    %619 = vmatmul.mubr.f32.gmra.mrb[0].mxu0 %v384
    %v620 = vpop.f32.mrb[0].mxu0
    %v621 = vadd.f32 0.0, %v620
    %v622 = vpop.f32.mrb[0].mxu0
    %623 = vdwg.mxu0
    %v624 = vmul.f32 %v616, %v72
    %v625 = vadd.f32 %v286, %v624
    %v626 = vmul.f32 %v621, %v470
    %v627 = vadd.f32 %v625, %v626
    %v628 = vmul.f32 %v466, %v466
    %v629 = vsub.f32 1.0, %v628
    %v630 = vmul.f32 %v629, %v627
    %v631 = vsub.f32 %v470, %v630
    %v632 = vmul.f32 %v544, %v467
    %v633 = vmul.f32 %v386, %v631
    %v634 = vadd.f32 %v632, %v633
    %v635 = vadd.f32 %v634, %v630
    %636 = vst [vmem:[#allocation8] sm:$0xff] %v635
    // Predicated region
    $region46: #{_cont_gru_delay_impl.1} parent=1 // pred_check
      _
    $region47: #{_cont_gru_delay_impl.1} parent=1 // pred_check_branch
      %638 = sbr.rel (0) target = $region49
    $region48: #{_cont_gru_delay_impl.1} parent=1 // pred_region
      %s640 = ssub.s32 128, 128
      %641 = vsyncadd [#allocation4], %s640
      %s643 = sshll.u32 [#allocation8], 4
      %s644 = int_to_ptr.vmem [resolvable:$true] %s643
      %646 = dma.vmem_to_hbm [thread:$0]  %s644, 128, %s8, [#allocation4]
    $region49: #{_cont_gru_delay_impl.1} parent=1 // pred_fallthru
      _
    // Predicated region
    $region50: #{_cont_gru_delay_impl.1} parent=1 // pred_check
      _
    $region51: #{_cont_gru_delay_impl.1} parent=1 // pred_check_branch
      %648 = sbr.rel (0) target = $region53
    $region52: #{_cont_gru_delay_impl.1} parent=1 // pred_region
      %649 = dma.done [#allocation4], 128
    $region53: #{_cont_gru_delay_impl.1} parent=1 // pred_fallthru
      _
    %650 = vsyncpa [#allocation3], 1
    %651 = vsyncpa [#allocation6], 1
    %652 = vsyncpa [#allocation4], 1

</llo_original>
